<compile_context>
chip_gen: v7x
topology: tpu7x:2x2x1
jax: 0.10.0
libtpu: 0.0.40
codegen_flags: <defaults>
</compile_context>

<pallas_src>
import math
from functools import partial

import jax
import jax.numpy as jnp
from jax.experimental import pallas as pl
from jax.experimental.pallas import tpu as pltpu


# ----------------------------- kernel helpers ------------------------------

def _layernorm(x, gamma, beta, eps=1e-6):
    mean = jnp.mean(x, axis=-1, keepdims=True)
    xc = x - mean
    var = jnp.mean(xc * xc, axis=-1, keepdims=True)
    return xc * jax.lax.rsqrt(var + eps) * gamma + beta


def _gelu_tanh(x):
    # tanh-approx GELU: tanh goes to the EUP (free bundle slot) instead of a
    # VALU-heavy erf polynomial.  Max abs error vs exact erf-GELU ~1e-3.
    c = math.sqrt(2.0 / math.pi)
    return 0.5 * x * (1.0 + jnp.tanh(c * (x + 0.044715 * x * x * x)))


def _make_kernel(tb, n, e, num_heads, head_dim):
    def kernel(x_ref, bias_ref,
               g1_ref, be1_ref, wqkv_ref, bqkv_ref, wo_ref, bo_ref,
               g2_ref, be2_ref, wm1_ref, bm1_ref, wm2_ref, bm2_ref,
               o_ref):
        x = x_ref[...]                                    # (TB*N, E) f32

        # ---- LN1 (f32 VPU) + fused QKV matmul (bf16 operands, f32 accumulate) ----
        y = _layernorm(x, g1_ref[...], be1_ref[...]).astype(jnp.bfloat16)
        qkv = jnp.dot(y, wqkv_ref[...], preferred_element_type=jnp.float32)
        qkv = qkv + bqkv_ref[...]                         # (TB*N, 3E) f32
        # NOTE: 1/sqrt(head_dim) is pre-folded into the Q columns of wqkv/bqkv.

        # Lane-aligned E-wide Q/K/V slices; reshape while still f32 (free major
        # split since N is a multiple of 8 sublanes); one bf16 cast each.
        q3 = qkv[:, :e].reshape(tb, n, e).astype(jnp.bfloat16)
        k3 = qkv[:, e:2 * e].reshape(tb, n, e).astype(jnp.bfloat16)
        v3 = qkv[:, 2 * e:].reshape(tb, n, e).astype(jnp.bfloat16)

        bias = bias_ref[...]                              # (TB, N, N) f32 (precomputed)

        # ---- attention: batched over TB via a leading batch dim; num_heads is
        #      a small static constant so this unroll stays bounded & tiny. ----
        head_outs = []
        for h in range(num_heads):
            lo = h * head_dim
            qh = q3[:, :, lo:lo + head_dim]               # (TB, N, hd) bf16
            kh = k3[:, :, lo:lo + head_dim]
            vh = v3[:, :, lo:lo + head_dim]

            s = jnp.einsum('bqd,bkd->bqk', qh, kh,
                           preferred_element_type=jnp.float32) + bias   # (TB, N, N)
            s = s - jnp.max(s, axis=-1, keepdims=True)
            p = jnp.exp(s)
            p = p * pl.reciprocal(jnp.sum(p, axis=-1, keepdims=True), approx=True)

            head_outs.append(
                jnp.einsum('bqk,bkd->bqd', p.astype(jnp.bfloat16), vh,
                           preferred_element_type=jnp.float32))          # (TB, N, hd)

        # Lane-concatenate heads (XLU slot) -> single K=E out-projection matmul.
        ctx = jnp.concatenate(head_outs, axis=-1).reshape(tb * n, e)      # (rows, E) f32
        attn = jnp.dot(ctx.astype(jnp.bfloat16), wo_ref[...],
                       preferred_element_type=jnp.float32) + bo_ref[...]

        # TODO(synk): nn.Dropout / attention-weight dropout are identity (eval mode).
        x2 = x + attn

        # ---- LN2 + MLP (bf16 matmul operands, f32 element-wise) ----
        y2 = _layernorm(x2, g2_ref[...], be2_ref[...]).astype(jnp.bfloat16)
        h1 = jnp.dot(y2, wm1_ref[...], preferred_element_type=jnp.float32) + bm1_ref[...]
        h1 = _gelu_tanh(h1).astype(jnp.bfloat16)
        h2 = jnp.dot(h1, wm2_ref[...], preferred_element_type=jnp.float32) + bm2_ref[...]

        o_ref[...] = (x2 + h2).astype(o_ref.dtype)        # (rows, E): lane-dense store

    return kernel


# ----------------------- one-time parameter preparation ---------------------

def prepare_block_params(params, num_heads):
    """Hoisted weight preprocessing: split/transpose the fused in-proj, fold the
    1/sqrt(head_dim) scale into the Q columns, concatenate to one (E, 3E) weight,
    pre-transpose all (in, out) weights and cast matmul weights to bf16."""
    E = params["ln1_g"].shape[0]
    H = params["mlp_w1"].shape[0]
    head_dim = E // num_heads
    scale = 1.0 / math.sqrt(head_dim)

    wq = params["in_proj_w"][:E].T * scale
    wk = params["in_proj_w"][E:2 * E].T
    wv = params["in_proj_w"][2 * E:].T
    wqkv = jnp.concatenate([wq, wk, wv], axis=1)                        # (E, 3E)
    bqkv = jnp.concatenate([params["in_proj_b"][:E] * scale,
                            params["in_proj_b"][E:2 * E],
                            params["in_proj_b"][2 * E:]]).reshape(1, 3 * E)
    return {
        "g1": params["ln1_g"].reshape(1, E).astype(jnp.float32),
        "be1": params["ln1_b"].reshape(1, E).astype(jnp.float32),
        "wqkv": wqkv.astype(jnp.bfloat16),
        "bqkv": bqkv.astype(jnp.float32),
        "wo": params["out_proj_w"].T.astype(jnp.bfloat16),              # (E, E)
        "bo": params["out_proj_b"].reshape(1, E).astype(jnp.float32),
        "g2": params["ln2_g"].reshape(1, E).astype(jnp.float32),
        "be2": params["ln2_b"].reshape(1, E).astype(jnp.float32),
        "wm1": params["mlp_w1"].T.astype(jnp.bfloat16),                 # (E, H)
        "bm1": params["mlp_b1"].reshape(1, H).astype(jnp.float32),
        "wm2": params["mlp_w2"].T.astype(jnp.bfloat16),                 # (H, E)
        "bm2": params["mlp_b2"].reshape(1, E).astype(jnp.float32),
        "w2": params["w2"],
        "alpha": params["alpha"],
    }


# ------------------------------ wrapper (glue) ------------------------------

def _pick_batch_tile(B, N, target_rows=512):
    """Largest divisor of B whose row tile (TB*N) fits target_rows, but never
    collapse the grid to a single step when B >= 2 (keeps the "parallel" axis
    shardable across both v7x TensorCores; v5e/v6e are single-TC so this only
    costs pipelining at the tiny demo shapes)."""
    cands = [t for t in range(1, B + 1) if B % t == 0 and t * N <= target_rows]
    if not cands:
        return 1
    tb = max(cands)
    if B // tb < 2:
        multi = [t for t in cands if B // t >= 2]
        if multi:
            tb = max(multi)
    return tb


@partial(jax.jit, static_argnames=("num_heads", "batch_tile"))
def transformer_block_forward(x, M, prep, num_heads, batch_tile=None):
    B, N, E = x.shape
    head_dim = E // num_heads
    TB = batch_tile if batch_tile is not None else _pick_batch_tile(B, N)
    rows = TB * N

    # Relational bias hoisted out of the kernel (tiny B*N*N*K flops in XLA):
    # avoids a K=8 lane axis padded 16x in VMEM and per-grid-step bias work.
    alpha_scaled = (jnp.tanh(prep["alpha"] + 1e-7) + 1.0) / 2.0
    w2s = jax.nn.softplus(prep["w2"] + 1e-7)
    w1s = alpha_scaled * w2s
    Mw = (w1s * (M == 1.0).astype(jnp.float32)
          + w2s * (M == 2.0).astype(jnp.float32))                        # (B, N, K)
    bias = jnp.einsum("bnk,bmk->bnm", Mw, Mw)                            # (B, N, N)
    nrm = jnp.sqrt(jnp.sum(bias * bias, axis=(1, 2), keepdims=True))
    bias = 50.0 * bias / jnp.maximum(nrm, 1e-12)

    xr = x.reshape(B * N, E)          # free (row-major) flatten: rows = matmul M dim

    shared2 = lambda arr: pl.BlockSpec(arr.shape, lambda i: (0, 0))
    kernel = _make_kernel(TB, N, E, num_heads, head_dim)

    out = pl.pallas_call(
        kernel,
        out_shape=jax.ShapeDtypeStruct((B * N, E), x.dtype),
        grid=(B // TB,),
        in_specs=[
            pl.BlockSpec((rows, E), lambda i: (i, 0)),                  # x row tile
            pl.BlockSpec((TB, N, N), lambda i: (i, 0, 0)),              # bias per group
            shared2(prep["g1"]), shared2(prep["be1"]),
            shared2(prep["wqkv"]), shared2(prep["bqkv"]),
            shared2(prep["wo"]), shared2(prep["bo"]),
            shared2(prep["g2"]), shared2(prep["be2"]),
            shared2(prep["wm1"]), shared2(prep["bm1"]),
            shared2(prep["wm2"]), shared2(prep["bm2"]),
        ],
        out_specs=pl.BlockSpec((rows, E), lambda i: (i, 0)),
        compiler_params=pltpu.CompilerParams(
            dimension_semantics=("parallel",),
            vmem_limit_bytes=32 * 1024 * 1024,   # well under v7x's 64 MiB physical
        ),
    )(xr, bias, prep["g1"], prep["be1"], prep["wqkv"], prep["bqkv"],
      prep["wo"], prep["bo"], prep["g2"], prep["be2"],
      prep["wm1"], prep["bm1"], prep["wm2"], prep["bm2"])
    return out.reshape(B, N, E)


# --------------------------- pure-JAX reference ----------------------------

def transformer_block_reference(x, M, params, num_heads):
    B, N, E = x.shape
    hd = E // num_heads

    alpha_scaled = (jnp.tanh(params["alpha"] + 1e-7) + 1.0) / 2.0
    w2s = jax.nn.softplus(params["w2"] + 1e-7)
    w1s = alpha_scaled * w2s
    Mw = w1s * (M == 1.0).astype(jnp.float32) + w2s * (M == 2.0).astype(jnp.float32)
    bias = jnp.einsum("bnk,bmk->bnm", Mw, Mw)
    nrm = jnp.sqrt(jnp.sum(bias * bias, axis=(1, 2), keepdims=True))
    bias = 50.0 * bias / jnp.maximum(nrm, 1e-12)

    def ln(v, g, b):
        mu = jnp.mean(v, axis=-1, keepdims=True)
        var = jnp.mean((v - mu) ** 2, axis=-1, keepdims=True)
        return (v - mu) / jnp.sqrt(var + 1e-6) * g + b

    y = ln(x, params["ln1_g"], params["ln1_b"])
    qkv = y @ params["in_proj_w"].T + params["in_proj_b"]
    q, k, v = jnp.split(qkv, 3, axis=-1)
    heads = lambda t: t.reshape(B, N, num_heads, hd).transpose(0, 2, 1, 3)
    q, k, v = heads(q), heads(k), heads(v)
    s = jnp.einsum("bhnd,bhmd->bhnm", q, k) / math.sqrt(hd) + bias[:, None]
    a = jax.nn.softmax(s, axis=-1)
    o = jnp.einsum("bhnm,bhmd->bhnd", a, v).transpose(0, 2, 1, 3).reshape(B, N, E)
    o = o @ params["out_proj_w"].T + params["out_proj_b"]
    x = x + o
    y = ln(x, params["ln2_g"], params["ln2_b"])
    h = y @ params["mlp_w1"].T + params["mlp_b1"]
    h = jax.nn.gelu(h, approximate=False)
    h = h @ params["mlp_w2"].T + params["mlp_b2"]
    return x + h


# ------------------------------- params init -------------------------------

def init_params(key, E, mlp_ratio=2.0, initial_alpha=0.5):
    H = int(E * mlp_ratio)
    ks = jax.random.split(key, 7)
    s = 0.05
    return {
        "ln1_g": jnp.ones((E,), jnp.float32),
        "ln1_b": jnp.zeros((E,), jnp.float32),
        "in_proj_w": s * jax.random.normal(ks[0], (3 * E, E), jnp.float32),
        "in_proj_b": s * jax.random.normal(ks[1], (3 * E,), jnp.float32),
        "out_proj_w": s * jax.random.normal(ks[2], (E, E), jnp.float32),
        "out_proj_b": jnp.zeros((E,), jnp.float32),
        "ln2_g": jnp.ones((E,), jnp.float32),
        "ln2_b": jnp.zeros((E,), jnp.float32),
        "mlp_w1": s * jax.random.normal(ks[3], (H, E), jnp.float32),
        "mlp_b1": s * jax.random.normal(ks[4], (H,), jnp.float32),
        "mlp_w2": s * jax.random.normal(ks[5], (E, H), jnp.float32),
        "mlp_b2": s * jax.random.normal(ks[6], (E,), jnp.float32),
        "w2": jnp.float32(1.0),
        "alpha": jnp.float32(initial_alpha),
    }


if __name__ == "__main__":
    # Small shapes consistent with the module (default embed_dim=256 scaled down
    # to 128 so the embedding axis is lane-dense on TPU).
    B, N, E, num_heads, K = 2, 8, 128, 4, 8

    key = jax.random.PRNGKey(0)
    kx, km, kp = jax.random.split(key, 3)
    x = jax.random.normal(kx, (B, N, E), jnp.float32)
    # M holds categorical structure codes in {0, 1, 2}, as expected by get_bias().
    M = jax.random.randint(km, (B, N, K), 0, 3).astype(jnp.float32)
    params = init_params(kp, E, mlp_ratio=2.0, initial_alpha=0.5)

    prep = prepare_block_params(params, num_heads)          # one-time weight prep

    out = transformer_block_forward(x, M, prep, num_heads)
    out = jax.block_until_ready(out)

    ref = transformer_block_reference(x, M, params, num_heads)
    assert out.shape == (B, N, E)
    err = float(jnp.max(jnp.abs(out - ref)))
    if not (err < 5e-2):
        raise AssertionError(f"kernel/reference mismatch: max abs err {err}")
    print("KERNEL_OK")
</pallas_src>

<mosaic_0001>
module attributes {stable_mosaic.version = 11 : i64} {
  func.func @kernel(%arg0: i32, %arg1: memref<8x128xf32, #tpu.memory_space<vmem>>, %arg2: memref<1x8x8xf32, #tpu.memory_space<vmem>>, %arg3: memref<1x128xf32, #tpu.memory_space<vmem>>, %arg4: memref<1x128xf32, #tpu.memory_space<vmem>>, %arg5: memref<128x384xbf16, #tpu.memory_space<vmem>>, %arg6: memref<1x384xf32, #tpu.memory_space<vmem>>, %arg7: memref<128x128xbf16, #tpu.memory_space<vmem>>, %arg8: memref<1x128xf32, #tpu.memory_space<vmem>>, %arg9: memref<1x128xf32, #tpu.memory_space<vmem>>, %arg10: memref<1x128xf32, #tpu.memory_space<vmem>>, %arg11: memref<128x256xbf16, #tpu.memory_space<vmem>>, %arg12: memref<1x256xf32, #tpu.memory_space<vmem>>, %arg13: memref<256x128xbf16, #tpu.memory_space<vmem>>, %arg14: memref<1x128xf32, #tpu.memory_space<vmem>>, %arg15: memref<8x128xf32, #tpu.memory_space<vmem>>) attributes {dimension_semantics = [#tpu.dimension_semantics<parallel>], iteration_bounds = array<i64: 2>, scalar_prefetch = 0 : i64, scratch_operands = 0 : i64, tpu.core_type = #tpu.core_type<tc>, window_params = [{transform_indices = @transform_0, window_bounds = array<i64: 8, 128>}, {transform_indices = @transform_1, window_bounds = array<i64: 1, 8, 8>}, {pipeline_mode = #tpu.pipeline_mode<synchronous>, transform_indices = @transform_2, window_bounds = array<i64: 1, 128>}, {pipeline_mode = #tpu.pipeline_mode<synchronous>, transform_indices = @transform_3, window_bounds = array<i64: 1, 128>}, {pipeline_mode = #tpu.pipeline_mode<synchronous>, transform_indices = @transform_4, window_bounds = array<i64: 128, 384>}, {pipeline_mode = #tpu.pipeline_mode<synchronous>, transform_indices = @transform_5, window_bounds = array<i64: 1, 384>}, {pipeline_mode = #tpu.pipeline_mode<synchronous>, transform_indices = @transform_6, window_bounds = array<i64: 128, 128>}, {pipeline_mode = #tpu.pipeline_mode<synchronous>, transform_indices = @transform_7, window_bounds = array<i64: 1, 128>}, {pipeline_mode = #tpu.pipeline_mode<synchronous>, transform_indices = @transform_8, window_bounds = array<i64: 1, 128>}, {pipeline_mode = #tpu.pipeline_mode<synchronous>, transform_indices = @transform_9, window_bounds = array<i64: 1, 128>}, {pipeline_mode = #tpu.pipeline_mode<synchronous>, transform_indices = @transform_10, window_bounds = array<i64: 128, 256>}, {pipeline_mode = #tpu.pipeline_mode<synchronous>, transform_indices = @transform_11, window_bounds = array<i64: 1, 256>}, {pipeline_mode = #tpu.pipeline_mode<synchronous>, transform_indices = @transform_12, window_bounds = array<i64: 256, 128>}, {pipeline_mode = #tpu.pipeline_mode<synchronous>, transform_indices = @transform_13, window_bounds = array<i64: 1, 128>}, {transform_indices = @transform_14, window_bounds = array<i64: 8, 128>}]} {
    %c0 = arith.constant 0 : index
    %c0_0 = arith.constant 0 : index
    %0 = vector.load %arg1[%c0, %c0_0] : memref<8x128xf32, #tpu.memory_space<vmem>>, vector<8x128xf32>
    %c0_1 = arith.constant 0 : index
    %c0_2 = arith.constant 0 : index
    %1 = vector.load %arg3[%c0_1, %c0_2] : memref<1x128xf32, #tpu.memory_space<vmem>>, vector<1x128xf32>
    %c0_3 = arith.constant 0 : index
    %c0_4 = arith.constant 0 : index
    %2 = vector.load %arg4[%c0_3, %c0_4] : memref<1x128xf32, #tpu.memory_space<vmem>>, vector<1x128xf32>
    %cst = arith.constant dense<0.000000e+00> : vector<8xf32>
    %3 = vector.multi_reduction <add>, %0, %cst [1] : vector<8x128xf32> to vector<8xf32>
    %4 = vector.shape_cast %3 : vector<8xf32> to vector<8x1xf32>
    %cst_5 = arith.constant 1.280000e+02 : f32
    %5 = vector.broadcast %cst_5 : f32 to vector<8x1xf32>
    %6 = arith.divf %4, %5 : vector<8x1xf32>
    %7 = vector.broadcast %6 : vector<8x1xf32> to vector<8x128xf32>
    %8 = arith.subf %0, %7 : vector<8x128xf32>
    %9 = arith.mulf %8, %8 : vector<8x128xf32>
    %cst_6 = arith.constant dense<0.000000e+00> : vector<8xf32>
    %10 = vector.multi_reduction <add>, %9, %cst_6 [1] : vector<8x128xf32> to vector<8xf32>
    %11 = vector.shape_cast %10 : vector<8xf32> to vector<8x1xf32>
    %cst_7 = arith.constant 1.280000e+02 : f32
    %12 = vector.broadcast %cst_7 : f32 to vector<8x1xf32>
    %13 = arith.divf %11, %12 : vector<8x1xf32>
    %cst_8 = arith.constant 9.99999997E-7 : f32
    %14 = vector.broadcast %cst_8 : f32 to vector<8x1xf32>
    %15 = arith.addf %13, %14 : vector<8x1xf32>
    %16 = math.rsqrt %15 : vector<8x1xf32>
    %17 = vector.broadcast %16 : vector<8x1xf32> to vector<8x128xf32>
    %18 = arith.mulf %8, %17 : vector<8x128xf32>
    %19 = vector.broadcast %1 : vector<1x128xf32> to vector<8x128xf32>
    %20 = arith.mulf %18, %19 : vector<8x128xf32>
    %21 = vector.broadcast %2 : vector<1x128xf32> to vector<8x128xf32>
    %22 = arith.addf %20, %21 : vector<8x128xf32>
    %23 = arith.truncf %22 : vector<8x128xf32> to vector<8x128xbf16>
    %c0_9 = arith.constant 0 : index
    %c0_10 = arith.constant 0 : index
    %24 = vector.load %arg5[%c0_9, %c0_10] : memref<128x384xbf16, #tpu.memory_space<vmem>>, vector<128x384xbf16>
    %cst_11 = arith.constant dense<0.000000e+00> : vector<8x384xf32>
    %25 = tpu.matmul %23, %24, %cst_11 {dimension_numbers = #tpu.dot_dimension_numbers<[1], [0], [0], [1], [0, 0, 1, 1], [], []>} : vector<8x128xbf16>, vector<128x384xbf16>, vector<8x384xf32> -> vector<8x384xf32>
    %c0_12 = arith.constant 0 : index
    %c0_13 = arith.constant 0 : index
    %26 = vector.load %arg6[%c0_12, %c0_13] : memref<1x384xf32, #tpu.memory_space<vmem>>, vector<1x384xf32>
    %27 = vector.broadcast %26 : vector<1x384xf32> to vector<8x384xf32>
    %28 = arith.addf %25, %27 : vector<8x384xf32>
    %29 = vector.extract_strided_slice %28 {offsets = [0, 0], sizes = [8, 128], strides = [1, 1]} : vector<8x384xf32> to vector<8x128xf32>
    %30 = vector.shape_cast %29 : vector<8x128xf32> to vector<1x8x128xf32>
    %31 = arith.truncf %30 : vector<1x8x128xf32> to vector<1x8x128xbf16>
    %32 = vector.extract_strided_slice %28 {offsets = [0, 128], sizes = [8, 128], strides = [1, 1]} : vector<8x384xf32> to vector<8x128xf32>
    %33 = vector.shape_cast %32 : vector<8x128xf32> to vector<1x8x128xf32>
    %34 = arith.truncf %33 : vector<1x8x128xf32> to vector<1x8x128xbf16>
    %35 = vector.extract_strided_slice %28 {offsets = [0, 256], sizes = [8, 128], strides = [1, 1]} : vector<8x384xf32> to vector<8x128xf32>
    %36 = vector.shape_cast %35 : vector<8x128xf32> to vector<1x8x128xf32>
    %37 = arith.truncf %36 : vector<1x8x128xf32> to vector<1x8x128xbf16>
    %c0_14 = arith.constant 0 : index
    %c0_15 = arith.constant 0 : index
    %c0_16 = arith.constant 0 : index
    %38 = vector.load %arg2[%c0_14, %c0_15, %c0_16] : memref<1x8x8xf32, #tpu.memory_space<vmem>>, vector<1x8x8xf32>
    %39 = vector.extract_strided_slice %31 {offsets = [0, 0, 0], sizes = [1, 8, 32], strides = [1, 1, 1]} : vector<1x8x128xbf16> to vector<1x8x32xbf16>
    %40 = vector.extract_strided_slice %34 {offsets = [0, 0, 0], sizes = [1, 8, 32], strides = [1, 1, 1]} : vector<1x8x128xbf16> to vector<1x8x32xbf16>
    %41 = vector.extract_strided_slice %37 {offsets = [0, 0, 0], sizes = [1, 8, 32], strides = [1, 1, 1]} : vector<1x8x128xbf16> to vector<1x8x32xbf16>
    "tpu.trace_start"() <{level = 10 : i32, message = "bqd,bkd->bqk"}> : () -> ()
    %cst_17 = arith.constant dense<0.000000e+00> : vector<1x8x8xf32>
    %42 = tpu.matmul %39, %40, %cst_17 {dimension_numbers = #tpu.dot_dimension_numbers<[2], [2], [1], [1], [0, 0, 0, 1, 1, 1], [0], [0]>} : vector<1x8x32xbf16>, vector<1x8x32xbf16>, vector<1x8x8xf32> -> vector<1x8x8xf32>
    "tpu.trace_stop"() : () -> ()
    %43 = arith.addf %42, %38 : vector<1x8x8xf32>
    %cst_18 = arith.constant dense<0xFF800000> : vector<1x8xf32>
    %44 = vector.multi_reduction <maximumf>, %43, %cst_18 [2] : vector<1x8x8xf32> to vector<1x8xf32>
    %45 = vector.shape_cast %44 : vector<1x8xf32> to vector<1x8x1xf32>
    %46 = vector.broadcast %45 : vector<1x8x1xf32> to vector<1x8x8xf32>
    %47 = arith.subf %43, %46 : vector<1x8x8xf32>
    %48 = math.exp %47 : vector<1x8x8xf32>
    %cst_19 = arith.constant dense<0.000000e+00> : vector<1x8xf32>
    %49 = vector.multi_reduction <add>, %48, %cst_19 [2] : vector<1x8x8xf32> to vector<1x8xf32>
    %50 = vector.shape_cast %49 : vector<1x8xf32> to vector<1x8x1xf32>
    %51 = tpu.reciprocal %50 {approx = true} : vector<1x8x1xf32> -> vector<1x8x1xf32>
    %52 = vector.broadcast %51 : vector<1x8x1xf32> to vector<1x8x8xf32>
    %53 = arith.mulf %48, %52 : vector<1x8x8xf32>
    %54 = arith.truncf %53 : vector<1x8x8xf32> to vector<1x8x8xbf16>
    "tpu.trace_start"() <{level = 10 : i32, message = "bqk,bkd->bqd"}> : () -> ()
    %cst_20 = arith.constant dense<0.000000e+00> : vector<1x8x32xf32>
    %55 = tpu.matmul %54, %41, %cst_20 {dimension_numbers = #tpu.dot_dimension_numbers<[2], [1], [1], [2], [0, 0, 0, 1, 1, 2], [0], [0]>} : vector<1x8x8xbf16>, vector<1x8x32xbf16>, vector<1x8x32xf32> -> vector<1x8x32xf32>
    "tpu.trace_stop"() : () -> ()
    %56 = vector.extract_strided_slice %31 {offsets = [0, 0, 32], sizes = [1, 8, 32], strides = [1, 1, 1]} : vector<1x8x128xbf16> to vector<1x8x32xbf16>
    %57 = vector.extract_strided_slice %34 {offsets = [0, 0, 32], sizes = [1, 8, 32], strides = [1, 1, 1]} : vector<1x8x128xbf16> to vector<1x8x32xbf16>
    %58 = vector.extract_strided_slice %37 {offsets = [0, 0, 32], sizes = [1, 8, 32], strides = [1, 1, 1]} : vector<1x8x128xbf16> to vector<1x8x32xbf16>
    "tpu.trace_start"() <{level = 10 : i32, message = "bqd,bkd->bqk"}> : () -> ()
    %cst_21 = arith.constant dense<0.000000e+00> : vector<1x8x8xf32>
    %59 = tpu.matmul %56, %57, %cst_21 {dimension_numbers = #tpu.dot_dimension_numbers<[2], [2], [1], [1], [0, 0, 0, 1, 1, 1], [0], [0]>} : vector<1x8x32xbf16>, vector<1x8x32xbf16>, vector<1x8x8xf32> -> vector<1x8x8xf32>
    "tpu.trace_stop"() : () -> ()
    %60 = arith.addf %59, %38 : vector<1x8x8xf32>
    %cst_22 = arith.constant dense<0xFF800000> : vector<1x8xf32>
    %61 = vector.multi_reduction <maximumf>, %60, %cst_22 [2] : vector<1x8x8xf32> to vector<1x8xf32>
    %62 = vector.shape_cast %61 : vector<1x8xf32> to vector<1x8x1xf32>
    %63 = vector.broadcast %62 : vector<1x8x1xf32> to vector<1x8x8xf32>
    %64 = arith.subf %60, %63 : vector<1x8x8xf32>
    %65 = math.exp %64 : vector<1x8x8xf32>
    %cst_23 = arith.constant dense<0.000000e+00> : vector<1x8xf32>
    %66 = vector.multi_reduction <add>, %65, %cst_23 [2] : vector<1x8x8xf32> to vector<1x8xf32>
    %67 = vector.shape_cast %66 : vector<1x8xf32> to vector<1x8x1xf32>
    %68 = tpu.reciprocal %67 {approx = true} : vector<1x8x1xf32> -> vector<1x8x1xf32>
    %69 = vector.broadcast %68 : vector<1x8x1xf32> to vector<1x8x8xf32>
    %70 = arith.mulf %65, %69 : vector<1x8x8xf32>
    %71 = arith.truncf %70 : vector<1x8x8xf32> to vector<1x8x8xbf16>
    "tpu.trace_start"() <{level = 10 : i32, message = "bqk,bkd->bqd"}> : () -> ()
    %cst_24 = arith.constant dense<0.000000e+00> : vector<1x8x32xf32>
    %72 = tpu.matmul %71, %58, %cst_24 {dimension_numbers = #tpu.dot_dimension_numbers<[2], [1], [1], [2], [0, 0, 0, 1, 1, 2], [0], [0]>} : vector<1x8x8xbf16>, vector<1x8x32xbf16>, vector<1x8x32xf32> -> vector<1x8x32xf32>
    "tpu.trace_stop"() : () -> ()
    %73 = vector.extract_strided_slice %31 {offsets = [0, 0, 64], sizes = [1, 8, 32], strides = [1, 1, 1]} : vector<1x8x128xbf16> to vector<1x8x32xbf16>
    %74 = vector.extract_strided_slice %34 {offsets = [0, 0, 64], sizes = [1, 8, 32], strides = [1, 1, 1]} : vector<1x8x128xbf16> to vector<1x8x32xbf16>
    %75 = vector.extract_strided_slice %37 {offsets = [0, 0, 64], sizes = [1, 8, 32], strides = [1, 1, 1]} : vector<1x8x128xbf16> to vector<1x8x32xbf16>
    "tpu.trace_start"() <{level = 10 : i32, message = "bqd,bkd->bqk"}> : () -> ()
    %cst_25 = arith.constant dense<0.000000e+00> : vector<1x8x8xf32>
    %76 = tpu.matmul %73, %74, %cst_25 {dimension_numbers = #tpu.dot_dimension_numbers<[2], [2], [1], [1], [0, 0, 0, 1, 1, 1], [0], [0]>} : vector<1x8x32xbf16>, vector<1x8x32xbf16>, vector<1x8x8xf32> -> vector<1x8x8xf32>
    "tpu.trace_stop"() : () -> ()
    %77 = arith.addf %76, %38 : vector<1x8x8xf32>
    %cst_26 = arith.constant dense<0xFF800000> : vector<1x8xf32>
    %78 = vector.multi_reduction <maximumf>, %77, %cst_26 [2] : vector<1x8x8xf32> to vector<1x8xf32>
    %79 = vector.shape_cast %78 : vector<1x8xf32> to vector<1x8x1xf32>
    %80 = vector.broadcast %79 : vector<1x8x1xf32> to vector<1x8x8xf32>
    %81 = arith.subf %77, %80 : vector<1x8x8xf32>
    %82 = math.exp %81 : vector<1x8x8xf32>
    %cst_27 = arith.constant dense<0.000000e+00> : vector<1x8xf32>
    %83 = vector.multi_reduction <add>, %82, %cst_27 [2] : vector<1x8x8xf32> to vector<1x8xf32>
    %84 = vector.shape_cast %83 : vector<1x8xf32> to vector<1x8x1xf32>
    %85 = tpu.reciprocal %84 {approx = true} : vector<1x8x1xf32> -> vector<1x8x1xf32>
    %86 = vector.broadcast %85 : vector<1x8x1xf32> to vector<1x8x8xf32>
    %87 = arith.mulf %82, %86 : vector<1x8x8xf32>
    %88 = arith.truncf %87 : vector<1x8x8xf32> to vector<1x8x8xbf16>
    "tpu.trace_start"() <{level = 10 : i32, message = "bqk,bkd->bqd"}> : () -> ()
    %cst_28 = arith.constant dense<0.000000e+00> : vector<1x8x32xf32>
    %89 = tpu.matmul %88, %75, %cst_28 {dimension_numbers = #tpu.dot_dimension_numbers<[2], [1], [1], [2], [0, 0, 0, 1, 1, 2], [0], [0]>} : vector<1x8x8xbf16>, vector<1x8x32xbf16>, vector<1x8x32xf32> -> vector<1x8x32xf32>
    "tpu.trace_stop"() : () -> ()
    %90 = vector.extract_strided_slice %31 {offsets = [0, 0, 96], sizes = [1, 8, 32], strides = [1, 1, 1]} : vector<1x8x128xbf16> to vector<1x8x32xbf16>
    %91 = vector.extract_strided_slice %34 {offsets = [0, 0, 96], sizes = [1, 8, 32], strides = [1, 1, 1]} : vector<1x8x128xbf16> to vector<1x8x32xbf16>
    %92 = vector.extract_strided_slice %37 {offsets = [0, 0, 96], sizes = [1, 8, 32], strides = [1, 1, 1]} : vector<1x8x128xbf16> to vector<1x8x32xbf16>
    "tpu.trace_start"() <{level = 10 : i32, message = "bqd,bkd->bqk"}> : () -> ()
    %cst_29 = arith.constant dense<0.000000e+00> : vector<1x8x8xf32>
    %93 = tpu.matmul %90, %91, %cst_29 {dimension_numbers = #tpu.dot_dimension_numbers<[2], [2], [1], [1], [0, 0, 0, 1, 1, 1], [0], [0]>} : vector<1x8x32xbf16>, vector<1x8x32xbf16>, vector<1x8x8xf32> -> vector<1x8x8xf32>
    "tpu.trace_stop"() : () -> ()
    %94 = arith.addf %93, %38 : vector<1x8x8xf32>
    %cst_30 = arith.constant dense<0xFF800000> : vector<1x8xf32>
    %95 = vector.multi_reduction <maximumf>, %94, %cst_30 [2] : vector<1x8x8xf32> to vector<1x8xf32>
    %96 = vector.shape_cast %95 : vector<1x8xf32> to vector<1x8x1xf32>
    %97 = vector.broadcast %96 : vector<1x8x1xf32> to vector<1x8x8xf32>
    %98 = arith.subf %94, %97 : vector<1x8x8xf32>
    %99 = math.exp %98 : vector<1x8x8xf32>
    %cst_31 = arith.constant dense<0.000000e+00> : vector<1x8xf32>
    %100 = vector.multi_reduction <add>, %99, %cst_31 [2] : vector<1x8x8xf32> to vector<1x8xf32>
    %101 = vector.shape_cast %100 : vector<1x8xf32> to vector<1x8x1xf32>
    %102 = tpu.reciprocal %101 {approx = true} : vector<1x8x1xf32> -> vector<1x8x1xf32>
    %103 = vector.broadcast %102 : vector<1x8x1xf32> to vector<1x8x8xf32>
    %104 = arith.mulf %99, %103 : vector<1x8x8xf32>
    %105 = arith.truncf %104 : vector<1x8x8xf32> to vector<1x8x8xbf16>
    "tpu.trace_start"() <{level = 10 : i32, message = "bqk,bkd->bqd"}> : () -> ()
    %cst_32 = arith.constant dense<0.000000e+00> : vector<1x8x32xf32>
    %106 = tpu.matmul %105, %92, %cst_32 {dimension_numbers = #tpu.dot_dimension_numbers<[2], [1], [1], [2], [0, 0, 0, 1, 1, 2], [0], [0]>} : vector<1x8x8xbf16>, vector<1x8x32xbf16>, vector<1x8x32xf32> -> vector<1x8x32xf32>
    "tpu.trace_stop"() : () -> ()
    %107 = tpu.concatenate %55, %72, %89, %106 in 2 : vector<1x8x32xf32>, vector<1x8x32xf32>, vector<1x8x32xf32>, vector<1x8x32xf32> -> vector<1x8x128xf32>
    %108 = vector.shape_cast %107 : vector<1x8x128xf32> to vector<8x128xf32>
    %109 = arith.truncf %108 : vector<8x128xf32> to vector<8x128xbf16>
    %c0_33 = arith.constant 0 : index
    %c0_34 = arith.constant 0 : index
    %110 = vector.load %arg7[%c0_33, %c0_34] : memref<128x128xbf16, #tpu.memory_space<vmem>>, vector<128x128xbf16>
    %cst_35 = arith.constant dense<0.000000e+00> : vector<8x128xf32>
    %111 = tpu.matmul %109, %110, %cst_35 {dimension_numbers = #tpu.dot_dimension_numbers<[1], [0], [0], [1], [0, 0, 1, 1], [], []>} : vector<8x128xbf16>, vector<128x128xbf16>, vector<8x128xf32> -> vector<8x128xf32>
    %c0_36 = arith.constant 0 : index
    %c0_37 = arith.constant 0 : index
    %112 = vector.load %arg8[%c0_36, %c0_37] : memref<1x128xf32, #tpu.memory_space<vmem>>, vector<1x128xf32>
    %113 = vector.broadcast %112 : vector<1x128xf32> to vector<8x128xf32>
    %114 = arith.addf %111, %113 : vector<8x128xf32>
    %115 = arith.addf %0, %114 : vector<8x128xf32>
    %c0_38 = arith.constant 0 : index
    %c0_39 = arith.constant 0 : index
    %116 = vector.load %arg9[%c0_38, %c0_39] : memref<1x128xf32, #tpu.memory_space<vmem>>, vector<1x128xf32>
    %c0_40 = arith.constant 0 : index
    %c0_41 = arith.constant 0 : index
    %117 = vector.load %arg10[%c0_40, %c0_41] : memref<1x128xf32, #tpu.memory_space<vmem>>, vector<1x128xf32>
    %cst_42 = arith.constant dense<0.000000e+00> : vector<8xf32>
    %118 = vector.multi_reduction <add>, %115, %cst_42 [1] : vector<8x128xf32> to vector<8xf32>
    %119 = vector.shape_cast %118 : vector<8xf32> to vector<8x1xf32>
    %cst_43 = arith.constant 1.280000e+02 : f32
    %120 = vector.broadcast %cst_43 : f32 to vector<8x1xf32>
    %121 = arith.divf %119, %120 : vector<8x1xf32>
    %122 = vector.broadcast %121 : vector<8x1xf32> to vector<8x128xf32>
    %123 = arith.subf %115, %122 : vector<8x128xf32>
    %124 = arith.mulf %123, %123 : vector<8x128xf32>
    %cst_44 = arith.constant dense<0.000000e+00> : vector<8xf32>
    %125 = vector.multi_reduction <add>, %124, %cst_44 [1] : vector<8x128xf32> to vector<8xf32>
    %126 = vector.shape_cast %125 : vector<8xf32> to vector<8x1xf32>
    %cst_45 = arith.constant 1.280000e+02 : f32
    %127 = vector.broadcast %cst_45 : f32 to vector<8x1xf32>
    %128 = arith.divf %126, %127 : vector<8x1xf32>
    %cst_46 = arith.constant 9.99999997E-7 : f32
    %129 = vector.broadcast %cst_46 : f32 to vector<8x1xf32>
    %130 = arith.addf %128, %129 : vector<8x1xf32>
    %131 = math.rsqrt %130 : vector<8x1xf32>
    %132 = vector.broadcast %131 : vector<8x1xf32> to vector<8x128xf32>
    %133 = arith.mulf %123, %132 : vector<8x128xf32>
    %134 = vector.broadcast %116 : vector<1x128xf32> to vector<8x128xf32>
    %135 = arith.mulf %133, %134 : vector<8x128xf32>
    %136 = vector.broadcast %117 : vector<1x128xf32> to vector<8x128xf32>
    %137 = arith.addf %135, %136 : vector<8x128xf32>
    %138 = arith.truncf %137 : vector<8x128xf32> to vector<8x128xbf16>
    %c0_47 = arith.constant 0 : index
    %c0_48 = arith.constant 0 : index
    %139 = vector.load %arg11[%c0_47, %c0_48] : memref<128x256xbf16, #tpu.memory_space<vmem>>, vector<128x256xbf16>
    %cst_49 = arith.constant dense<0.000000e+00> : vector<8x256xf32>
    %140 = tpu.matmul %138, %139, %cst_49 {dimension_numbers = #tpu.dot_dimension_numbers<[1], [0], [0], [1], [0, 0, 1, 1], [], []>} : vector<8x128xbf16>, vector<128x256xbf16>, vector<8x256xf32> -> vector<8x256xf32>
    %c0_50 = arith.constant 0 : index
    %c0_51 = arith.constant 0 : index
    %141 = vector.load %arg12[%c0_50, %c0_51] : memref<1x256xf32, #tpu.memory_space<vmem>>, vector<1x256xf32>
    %142 = vector.broadcast %141 : vector<1x256xf32> to vector<8x256xf32>
    %143 = arith.addf %140, %142 : vector<8x256xf32>
    %cst_52 = arith.constant 5.000000e-01 : f32
    %144 = vector.broadcast %cst_52 : f32 to vector<8x256xf32>
    %145 = arith.mulf %144, %143 : vector<8x256xf32>
    %cst_53 = arith.constant 4.471500e-02 : f32
    %146 = vector.broadcast %cst_53 : f32 to vector<8x256xf32>
    %147 = arith.mulf %146, %143 : vector<8x256xf32>
    %148 = arith.mulf %147, %143 : vector<8x256xf32>
    %149 = arith.mulf %148, %143 : vector<8x256xf32>
    %150 = arith.addf %143, %149 : vector<8x256xf32>
    %cst_54 = arith.constant 0.797884583 : f32
    %151 = vector.broadcast %cst_54 : f32 to vector<8x256xf32>
    %152 = arith.mulf %151, %150 : vector<8x256xf32>
    %153 = math.tanh %152 : vector<8x256xf32>
    %cst_55 = arith.constant 1.000000e+00 : f32
    %154 = vector.broadcast %cst_55 : f32 to vector<8x256xf32>
    %155 = arith.addf %154, %153 : vector<8x256xf32>
    %156 = arith.mulf %145, %155 : vector<8x256xf32>
    %157 = arith.truncf %156 : vector<8x256xf32> to vector<8x256xbf16>
    %c0_56 = arith.constant 0 : index
    %c0_57 = arith.constant 0 : index
    %158 = vector.load %arg13[%c0_56, %c0_57] : memref<256x128xbf16, #tpu.memory_space<vmem>>, vector<256x128xbf16>
    %cst_58 = arith.constant dense<0.000000e+00> : vector<8x128xf32>
    %159 = tpu.matmul %157, %158, %cst_58 {dimension_numbers = #tpu.dot_dimension_numbers<[1], [0], [0], [1], [0, 0, 1, 1], [], []>} : vector<8x256xbf16>, vector<256x128xbf16>, vector<8x128xf32> -> vector<8x128xf32>
    %c0_59 = arith.constant 0 : index
    %c0_60 = arith.constant 0 : index
    %160 = vector.load %arg14[%c0_59, %c0_60] : memref<1x128xf32, #tpu.memory_space<vmem>>, vector<1x128xf32>
    %161 = vector.broadcast %160 : vector<1x128xf32> to vector<8x128xf32>
    %162 = arith.addf %159, %161 : vector<8x128xf32>
    %163 = arith.addf %115, %162 : vector<8x128xf32>
    %c0_61 = arith.constant 0 : index
    %c0_62 = arith.constant 0 : index
    %164 = vector.load %arg15[%c0_61, %c0_62] : memref<8x128xf32, #tpu.memory_space<vmem>>, vector<8x128xf32>
    tpu.vector_store %arg15[%c0_61, %c0_62], %163 {strides = array<i32>} : memref<8x128xf32, #tpu.memory_space<vmem>>, vector<8x128xf32>,
    return
  }
  func.func @transform_0(%arg0: i32) -> (i32, i32) {
    %c0_i32 = arith.constant 0 : i32
    %c0_i32_0 = arith.constant 0 : i32
    return %arg0, %c0_i32 : i32, i32
  }
  func.func @transform_1(%arg0: i32) -> (i32, i32, i32) {
    %c0_i32 = arith.constant 0 : i32
    %c0_i32_0 = arith.constant 0 : i32
    %c0_i32_1 = arith.constant 0 : i32
    return %arg0, %c0_i32, %c0_i32_0 : i32, i32, i32
  }
  func.func @transform_2(%arg0: i32) -> (i32, i32) {
    %c0_i32 = arith.constant 0 : i32
    %c0_i32_0 = arith.constant 0 : i32
    %c0_i32_1 = arith.constant 0 : i32
    return %c0_i32, %c0_i32_0 : i32, i32
  }
  func.func @transform_3(%arg0: i32) -> (i32, i32) {
    %c0_i32 = arith.constant 0 : i32
    %c0_i32_0 = arith.constant 0 : i32
    %c0_i32_1 = arith.constant 0 : i32
    return %c0_i32, %c0_i32_0 : i32, i32
  }
  func.func @transform_4(%arg0: i32) -> (i32, i32) {
    %c0_i32 = arith.constant 0 : i32
    %c0_i32_0 = arith.constant 0 : i32
    %c0_i32_1 = arith.constant 0 : i32
    return %c0_i32, %c0_i32_0 : i32, i32
  }
  func.func @transform_5(%arg0: i32) -> (i32, i32) {
    %c0_i32 = arith.constant 0 : i32
    %c0_i32_0 = arith.constant 0 : i32
    %c0_i32_1 = arith.constant 0 : i32
    return %c0_i32, %c0_i32_0 : i32, i32
  }
  func.func @transform_6(%arg0: i32) -> (i32, i32) {
    %c0_i32 = arith.constant 0 : i32
    %c0_i32_0 = arith.constant 0 : i32
    %c0_i32_1 = arith.constant 0 : i32
    return %c0_i32, %c0_i32_0 : i32, i32
  }
  func.func @transform_7(%arg0: i32) -> (i32, i32) {
    %c0_i32 = arith.constant 0 : i32
    %c0_i32_0 = arith.constant 0 : i32
    %c0_i32_1 = arith.constant 0 : i32
    return %c0_i32, %c0_i32_0 : i32, i32
  }
  func.func @transform_8(%arg0: i32) -> (i32, i32) {
    %c0_i32 = arith.constant 0 : i32
    %c0_i32_0 = arith.constant 0 : i32
    %c0_i32_1 = arith.constant 0 : i32
    return %c0_i32, %c0_i32_0 : i32, i32
  }
  func.func @transform_9(%arg0: i32) -> (i32, i32) {
    %c0_i32 = arith.constant 0 : i32
    %c0_i32_0 = arith.constant 0 : i32
    %c0_i32_1 = arith.constant 0 : i32
    return %c0_i32, %c0_i32_0 : i32, i32
  }
  func.func @transform_10(%arg0: i32) -> (i32, i32) {
    %c0_i32 = arith.constant 0 : i32
    %c0_i32_0 = arith.constant 0 : i32
    %c0_i32_1 = arith.constant 0 : i32
    return %c0_i32, %c0_i32_0 : i32, i32
  }
  func.func @transform_11(%arg0: i32) -> (i32, i32) {
    %c0_i32 = arith.constant 0 : i32
    %c0_i32_0 = arith.constant 0 : i32
    %c0_i32_1 = arith.constant 0 : i32
    return %c0_i32, %c0_i32_0 : i32, i32
  }
  func.func @transform_12(%arg0: i32) -> (i32, i32) {
    %c0_i32 = arith.constant 0 : i32
    %c0_i32_0 = arith.constant 0 : i32
    %c0_i32_1 = arith.constant 0 : i32
    return %c0_i32, %c0_i32_0 : i32, i32
  }
  func.func @transform_13(%arg0: i32) -> (i32, i32) {
    %c0_i32 = arith.constant 0 : i32
    %c0_i32_0 = arith.constant 0 : i32
    %c0_i32_1 = arith.constant 0 : i32
    return %c0_i32, %c0_i32_0 : i32, i32
  }
  func.func @transform_14(%arg0: i32) -> (i32, i32) {
    %c0_i32 = arith.constant 0 : i32
    %c0_i32_0 = arith.constant 0 : i32
    return %arg0, %c0_i32 : i32, i32
  }
}

</mosaic_0001>

<llo_original>
// kernel: transformer_block_forward.1
$region0: #{transformer_block_forward.1}
  #allocation0 [shape = 'u32[]', space=smem, size = 0x4, offset = 0x4, fixed_abs, tag = 'smem constant byte address 0x4 - core index']
  #allocation1 [shape = 'u32[144,128]{1,0:T(1,128)}', space=vmem, size = 0x12000, scoped, tag = 'internal scratch']
  %s0 = inlined_call_operand.hbm [shape: f32[16,128], index: 0, kind: input, shape index: {}]
  %s1 = inlined_call_operand.vmem [shape: f32[2,8,8], index: 1, kind: input, shape index: {}]
  %s2 = inlined_call_operand.hbm [shape: f32[1,128], index: 2, kind: input, shape index: {}]
  %s3 = inlined_call_operand.hbm [shape: f32[1,128], index: 3, kind: input, shape index: {}]
  %s4 = inlined_call_operand.vmem [shape: bf16[128,384], index: 4, kind: input, shape index: {}]
  %s5 = inlined_call_operand.hbm [shape: f32[1,384], index: 5, kind: input, shape index: {}]
  %s6 = inlined_call_operand.hbm [shape: bf16[128,128], index: 6, kind: input, shape index: {}]
  %s7 = inlined_call_operand.hbm [shape: f32[1,128], index: 7, kind: input, shape index: {}]
  %s8 = inlined_call_operand.hbm [shape: f32[1,128], index: 8, kind: input, shape index: {}]
  %s9 = inlined_call_operand.hbm [shape: f32[1,128], index: 9, kind: input, shape index: {}]
  %s10 = inlined_call_operand.hbm [shape: bf16[128,256], index: 10, kind: input, shape index: {}]
  %s11 = inlined_call_operand.vmem [shape: f32[1,256], index: 11, kind: input, shape index: {}]
  %s12 = inlined_call_operand.hbm [shape: bf16[256,128], index: 12, kind: input, shape index: {}]
  %s13 = inlined_call_operand.hbm [shape: f32[1,128], index: 13, kind: input, shape index: {}]
  %s14 = inlined_call_operand.hbm [shape: f32[16,128], index: 14, kind: output, shape index: {}]
  %s15 = sld [smem:[#allocation0]]
  $region133: #{transformer_block_forward.1} parent=0
    _
  %s17 = ssub.s32 1, %s15
  %s18 = scalar_select 0, %s17, %s15
  $region1: #{transformer_block_forward.1} parent=0
    #allocation2 [shape = 'u8[8192]{0}', space=vmem, size = 0x2000, scoped, tag = 'input window, operand 0']
    #allocation3 [shape = 's32[2]{0}', space=sflag, size = 0x8, scoped, tag = 'scoped memory for transformer_block_forward.1']
    #allocation4 [shape = 's32[2]{0}', space=sflag, size = 0x8, scoped, tag = 'scoped memory for transformer_block_forward.1']
    #allocation5 [shape = 'u8[512]{0}', space=vmem, size = 0x400, scoped, tag = 'input window, operand 2, single buffered']
    #allocation6 [shape = 's32[1]{0}', space=sflag, size = 0x4, scoped, tag = 'scoped memory for transformer_block_forward.1']
    #allocation7 [shape = 'u8[512]{0}', space=vmem, size = 0x400, scoped, tag = 'input window, operand 3, single buffered']
    #allocation8 [shape = 'u8[1536]{0}', space=vmem, size = 0x800, scoped, tag = 'input window, operand 5, single buffered']
    #allocation9 [shape = 's32[1]{0}', space=sflag, size = 0x4, scoped, tag = 'scoped memory for transformer_block_forward.1']
    #allocation10 [shape = 'u8[32768]{0}', space=vmem, size = 0x8000, scoped, tag = 'input window, operand 6, single buffered']
    #allocation11 [shape = 'u8[512]{0}', space=vmem, size = 0x400, scoped, tag = 'input window, operand 7, single buffered']
    #allocation12 [shape = 's32[1]{0}', space=sflag, size = 0x4, scoped, tag = 'scoped memory for transformer_block_forward.1']
    #allocation13 [shape = 'u8[512]{0}', space=vmem, size = 0x400, scoped, tag = 'input window, operand 8, single buffered']
    #allocation14 [shape = 'u8[512]{0}', space=vmem, size = 0x400, scoped, tag = 'input window, operand 9, single buffered']
    #allocation15 [shape = 's32[1]{0}', space=sflag, size = 0x4, scoped, tag = 'scoped memory for transformer_block_forward.1']
    #allocation16 [shape = 'u8[65536]{0}', space=vmem, size = 0x10000, scoped, tag = 'input window, operand 10, single buffered']
    #allocation17 [shape = 'u8[65536]{0}', space=vmem, size = 0x10000, scoped, tag = 'input window, operand 12, single buffered']
    #allocation18 [shape = 's32[1]{0}', space=sflag, size = 0x4, scoped, tag = 'scoped memory for transformer_block_forward.1']
    #allocation19 [shape = 'u8[512]{0}', space=vmem, size = 0x400, scoped, tag = 'input window, operand 13, single buffered']
    #allocation20 [shape = 'u8[8192]{0}', space=vmem, size = 0x2000, scoped, tag = 'output window, operand 0']
    %19 = vsyncpa [#allocation3], 0
    %s20 = scalar_lea.sflag [#allocation3], 1
    %21 = vsyncpa %s20, 0
    %22 = vsyncpa [#allocation6], 0
    %23 = vsyncpa [#allocation9], 0
    %24 = vsyncpa [#allocation12], 0
    %25 = vsyncpa [#allocation15], 0
    %26 = vsyncpa [#allocation18], 0
    %27 = vsyncpa [#allocation4], 0
    %s28 = scalar_lea.sflag [#allocation4], 1
    %29 = vsyncpa %s28, 0
    loop: start=0, step=1, limit=4
    $region2: #{transformer_block_forward.1} parent=1 // loop_pre_header
      _
    $region3: #{transformer_block_forward.1} parent=1 // loop_header
      %s31 = sphi 0, %s35
      %p32 = scmp.ge.s32.totalorder %s31, 4
      %s41 = sphi 0, %s43
      %s44 = sphi 0, %s41
      %s45 = sphi 0, %s44
      %s61 = sphi 0, %s45
      %s67 = sphi 0, %s69
      %s70 = sphi 0, %s67
      %s71 = sphi 0, %s70
      %s87 = sphi 0, %s71
      %s91 = sphi 0, %s91
      %s93 = sphi 0, %s91
      %s94 = sphi 0, %s93
      %s108 = sphi 0, %s94
      %s112 = sphi 0, %s112
      %s114 = sphi 0, %s112
      %s115 = sphi 0, %s114
      %s129 = sphi 0, %s115
      %s133 = sphi 0, %s133
      %s135 = sphi 0, %s133
      %s136 = sphi 0, %s135
      %s150 = sphi 0, %s136
      %s154 = sphi 0, %s154
      %s156 = sphi 0, %s154
      %s157 = sphi 0, %s156
      %s171 = sphi 0, %s157
      %s175 = sphi 0, %s175
      %s177 = sphi 0, %s175
      %s178 = sphi 0, %s177
      %s192 = sphi 0, %s178
      %s196 = sphi 0, %s196
      %s198 = sphi 0, %s196
      %s199 = sphi 0, %s198
      %s213 = sphi 0, %s199
      %s217 = sphi 0, %s217
      %s219 = sphi 0, %s217
      %s220 = sphi 0, %s219
      %s234 = sphi 0, %s220
      %s238 = sphi 0, %s238
      %s240 = sphi 0, %s238
      %s241 = sphi 0, %s240
      %s255 = sphi 0, %s241
      %s259 = sphi 0, %s259
      %s261 = sphi 0, %s259
      %s262 = sphi 0, %s261
      %s276 = sphi 0, %s262
      %s280 = sphi 0, %s280
      %s282 = sphi 0, %s280
      %s283 = sphi 0, %s282
      %s297 = sphi 0, %s283
      %s301 = sphi 0, %s301
      %s303 = sphi 0, %s301
      %s304 = sphi 0, %s303
      %s318 = sphi 0, %s304
      %s322 = sphi 0, %s322
      %s324 = sphi 0, %s322
      %s325 = sphi 0, %s324
      %s339 = sphi 0, %s325
      %s345 = sphi 0, %s347
      %s348 = sphi 0, %s345
      %s349 = sphi 0, %s348
      %s365 = sphi 0, %s349
    $region4: #{transformer_block_forward.1} parent=1 // loop_header_branch
      %34 = sbr.rel (%p32) target = $region8
    $region5: #{transformer_block_forward.1} parent=1 // loop_body
      %s36 = ssub.s32 %s31, 1
      %s37 = ssub.s32 %s31, 2
      %s38 = sadd.s32 %s31, 1
      %s39 = ssub.s32 %s31, %s38
      %p40 = scmp.eq.s32.totalorder %s39, 0
      %s42 = sadd.s32 %s41, 1
      %s43 = scalar_select %p40, %s41, %s42
      %p46 = pneg %p40
      %p47 = scmp.eq.s32.totalorder %s31, 1
      %p48 = por %p46, %p47
      %p49 = scmp.ne.s32.totalorder %s41, %s44
      %p50 = scmp.eq.s32.totalorder %s31, 0
      %p51 = por %p49, %p50
      %p52 = scmp.ne.s32.totalorder %s41, %s44
      %p53 = scmp.eq.s32.totalorder %s36, 1
      %p54 = por %p52, %p53
      %p55 = scmp.ne.s32.totalorder %s44, %s45
      %p56 = scmp.eq.s32.totalorder %s36, 0
      %p57 = por %p55, %p56
      %p58 = scmp.ne.s32.totalorder %s44, %s45
      %p59 = scmp.eq.s32.totalorder %s37, 1
      %p60 = por %p58, %p59
      %p62 = scmp.ne.s32.totalorder %s45, %s61
      %p63 = scmp.eq.s32.totalorder %s37, 0
      %p64 = por %p62, %p63
      %s65 = ssub.s32 %s31, %s38
      %p66 = scmp.eq.s32.totalorder %s65, 0
      %s68 = sadd.s32 %s67, 1
      %s69 = scalar_select %p66, %s67, %s68
      %p72 = pneg %p66
      %p73 = scmp.eq.s32.totalorder %s31, 1
      %p74 = por %p72, %p73
      %p75 = scmp.ne.s32.totalorder %s67, %s70
      %p76 = scmp.eq.s32.totalorder %s31, 0
      %p77 = por %p75, %p76
      %p78 = scmp.ne.s32.totalorder %s67, %s70
      %p79 = scmp.eq.s32.totalorder %s36, 1
      %p80 = por %p78, %p79
      %p81 = scmp.ne.s32.totalorder %s70, %s71
      %p82 = scmp.eq.s32.totalorder %s36, 0
      %p83 = por %p81, %p82
      %p84 = scmp.ne.s32.totalorder %s70, %s71
      %p85 = scmp.eq.s32.totalorder %s37, 1
      %p86 = por %p84, %p85
      %p88 = scmp.ne.s32.totalorder %s71, %s87
      %p89 = scmp.eq.s32.totalorder %s37, 0
      %p90 = por %p88, %p89
      %s92 = sadd.s32 %s91, 1
      %p95 = scmp.eq.s32.totalorder %s31, 1
      %p96 = scmp.ne.s32.totalorder %s91, %s93
      %p97 = scmp.eq.s32.totalorder %s31, 0
      %p98 = por %p96, %p97
      %p99 = scmp.ne.s32.totalorder %s91, %s93
      %p100 = scmp.eq.s32.totalorder %s36, 1
      %p101 = por %p99, %p100
      %p102 = scmp.ne.s32.totalorder %s93, %s94
      %p103 = scmp.eq.s32.totalorder %s36, 0
      %p104 = por %p102, %p103
      %p105 = scmp.ne.s32.totalorder %s93, %s94
      %p106 = scmp.eq.s32.totalorder %s37, 1
      %p107 = por %p105, %p106
      %p109 = scmp.ne.s32.totalorder %s94, %s108
      %p110 = scmp.eq.s32.totalorder %s37, 0
      %p111 = por %p109, %p110
      %s113 = sadd.s32 %s112, 1
      %p116 = scmp.eq.s32.totalorder %s31, 1
      %p117 = scmp.ne.s32.totalorder %s112, %s114
      %p118 = scmp.eq.s32.totalorder %s31, 0
      %p119 = por %p117, %p118
      %p120 = scmp.ne.s32.totalorder %s112, %s114
      %p121 = scmp.eq.s32.totalorder %s36, 1
      %p122 = por %p120, %p121
      %p123 = scmp.ne.s32.totalorder %s114, %s115
      %p124 = scmp.eq.s32.totalorder %s36, 0
      %p125 = por %p123, %p124
      %p126 = scmp.ne.s32.totalorder %s114, %s115
      %p127 = scmp.eq.s32.totalorder %s37, 1
      %p128 = por %p126, %p127
      %p130 = scmp.ne.s32.totalorder %s115, %s129
      %p131 = scmp.eq.s32.totalorder %s37, 0
      %p132 = por %p130, %p131
      %s134 = sadd.s32 %s133, 1
      %p137 = scmp.eq.s32.totalorder %s31, 1
      %p138 = scmp.ne.s32.totalorder %s133, %s135
      %p139 = scmp.eq.s32.totalorder %s31, 0
      %p140 = por %p138, %p139
      %p141 = scmp.ne.s32.totalorder %s133, %s135
      %p142 = scmp.eq.s32.totalorder %s36, 1
      %p143 = por %p141, %p142
      %p144 = scmp.ne.s32.totalorder %s135, %s136
      %p145 = scmp.eq.s32.totalorder %s36, 0
      %p146 = por %p144, %p145
      %p147 = scmp.ne.s32.totalorder %s135, %s136
      %p148 = scmp.eq.s32.totalorder %s37, 1
      %p149 = por %p147, %p148
      %p151 = scmp.ne.s32.totalorder %s136, %s150
      %p152 = scmp.eq.s32.totalorder %s37, 0
      %p153 = por %p151, %p152
      %s155 = sadd.s32 %s154, 1
      %p158 = scmp.eq.s32.totalorder %s31, 1
      %p159 = scmp.ne.s32.totalorder %s154, %s156
      %p160 = scmp.eq.s32.totalorder %s31, 0
      %p161 = por %p159, %p160
      %p162 = scmp.ne.s32.totalorder %s154, %s156
      %p163 = scmp.eq.s32.totalorder %s36, 1
      %p164 = por %p162, %p163
      %p165 = scmp.ne.s32.totalorder %s156, %s157
      %p166 = scmp.eq.s32.totalorder %s36, 0
      %p167 = por %p165, %p166
      %p168 = scmp.ne.s32.totalorder %s156, %s157
      %p169 = scmp.eq.s32.totalorder %s37, 1
      %p170 = por %p168, %p169
      %p172 = scmp.ne.s32.totalorder %s157, %s171
      %p173 = scmp.eq.s32.totalorder %s37, 0
      %p174 = por %p172, %p173
      %s176 = sadd.s32 %s175, 1
      %p179 = scmp.eq.s32.totalorder %s31, 1
      %p180 = scmp.ne.s32.totalorder %s175, %s177
      %p181 = scmp.eq.s32.totalorder %s31, 0
      %p182 = por %p180, %p181
      %p183 = scmp.ne.s32.totalorder %s175, %s177
      %p184 = scmp.eq.s32.totalorder %s36, 1
      %p185 = por %p183, %p184
      %p186 = scmp.ne.s32.totalorder %s177, %s178
      %p187 = scmp.eq.s32.totalorder %s36, 0
      %p188 = por %p186, %p187
      %p189 = scmp.ne.s32.totalorder %s177, %s178
      %p190 = scmp.eq.s32.totalorder %s37, 1
      %p191 = por %p189, %p190
      %p193 = scmp.ne.s32.totalorder %s178, %s192
      %p194 = scmp.eq.s32.totalorder %s37, 0
      %p195 = por %p193, %p194
      %s197 = sadd.s32 %s196, 1
      %p200 = scmp.eq.s32.totalorder %s31, 1
      %p201 = scmp.ne.s32.totalorder %s196, %s198
      %p202 = scmp.eq.s32.totalorder %s31, 0
      %p203 = por %p201, %p202
      %p204 = scmp.ne.s32.totalorder %s196, %s198
      %p205 = scmp.eq.s32.totalorder %s36, 1
      %p206 = por %p204, %p205
      %p207 = scmp.ne.s32.totalorder %s198, %s199
      %p208 = scmp.eq.s32.totalorder %s36, 0
      %p209 = por %p207, %p208
      %p210 = scmp.ne.s32.totalorder %s198, %s199
      %p211 = scmp.eq.s32.totalorder %s37, 1
      %p212 = por %p210, %p211
      %p214 = scmp.ne.s32.totalorder %s199, %s213
      %p215 = scmp.eq.s32.totalorder %s37, 0
      %p216 = por %p214, %p215
      %s218 = sadd.s32 %s217, 1
      %p221 = scmp.eq.s32.totalorder %s31, 1
      %p222 = scmp.ne.s32.totalorder %s217, %s219
      %p223 = scmp.eq.s32.totalorder %s31, 0
      %p224 = por %p222, %p223
      %p225 = scmp.ne.s32.totalorder %s217, %s219
      %p226 = scmp.eq.s32.totalorder %s36, 1
      %p227 = por %p225, %p226
      %p228 = scmp.ne.s32.totalorder %s219, %s220
      %p229 = scmp.eq.s32.totalorder %s36, 0
      %p230 = por %p228, %p229
      %p231 = scmp.ne.s32.totalorder %s219, %s220
      %p232 = scmp.eq.s32.totalorder %s37, 1
      %p233 = por %p231, %p232
      %p235 = scmp.ne.s32.totalorder %s220, %s234
      %p236 = scmp.eq.s32.totalorder %s37, 0
      %p237 = por %p235, %p236
      %s239 = sadd.s32 %s238, 1
      %p242 = scmp.eq.s32.totalorder %s31, 1
      %p243 = scmp.ne.s32.totalorder %s238, %s240
      %p244 = scmp.eq.s32.totalorder %s31, 0
      %p245 = por %p243, %p244
      %p246 = scmp.ne.s32.totalorder %s238, %s240
      %p247 = scmp.eq.s32.totalorder %s36, 1
      %p248 = por %p246, %p247
      %p249 = scmp.ne.s32.totalorder %s240, %s241
      %p250 = scmp.eq.s32.totalorder %s36, 0
      %p251 = por %p249, %p250
      %p252 = scmp.ne.s32.totalorder %s240, %s241
      %p253 = scmp.eq.s32.totalorder %s37, 1
      %p254 = por %p252, %p253
      %p256 = scmp.ne.s32.totalorder %s241, %s255
      %p257 = scmp.eq.s32.totalorder %s37, 0
      %p258 = por %p256, %p257
      %s260 = sadd.s32 %s259, 1
      %p263 = scmp.eq.s32.totalorder %s31, 1
      %p264 = scmp.ne.s32.totalorder %s259, %s261
      %p265 = scmp.eq.s32.totalorder %s31, 0
      %p266 = por %p264, %p265
      %p267 = scmp.ne.s32.totalorder %s259, %s261
      %p268 = scmp.eq.s32.totalorder %s36, 1
      %p269 = por %p267, %p268
      %p270 = scmp.ne.s32.totalorder %s261, %s262
      %p271 = scmp.eq.s32.totalorder %s36, 0
      %p272 = por %p270, %p271
      %p273 = scmp.ne.s32.totalorder %s261, %s262
      %p274 = scmp.eq.s32.totalorder %s37, 1
      %p275 = por %p273, %p274
      %p277 = scmp.ne.s32.totalorder %s262, %s276
      %p278 = scmp.eq.s32.totalorder %s37, 0
      %p279 = por %p277, %p278
      %s281 = sadd.s32 %s280, 1
      %p284 = scmp.eq.s32.totalorder %s31, 1
      %p285 = scmp.ne.s32.totalorder %s280, %s282
      %p286 = scmp.eq.s32.totalorder %s31, 0
      %p287 = por %p285, %p286
      %p288 = scmp.ne.s32.totalorder %s280, %s282
      %p289 = scmp.eq.s32.totalorder %s36, 1
      %p290 = por %p288, %p289
      %p291 = scmp.ne.s32.totalorder %s282, %s283
      %p292 = scmp.eq.s32.totalorder %s36, 0
      %p293 = por %p291, %p292
      %p294 = scmp.ne.s32.totalorder %s282, %s283
      %p295 = scmp.eq.s32.totalorder %s37, 1
      %p296 = por %p294, %p295
      %p298 = scmp.ne.s32.totalorder %s283, %s297
      %p299 = scmp.eq.s32.totalorder %s37, 0
      %p300 = por %p298, %p299
      %s302 = sadd.s32 %s301, 1
      %p305 = scmp.eq.s32.totalorder %s31, 1
      %p306 = scmp.ne.s32.totalorder %s301, %s303
      %p307 = scmp.eq.s32.totalorder %s31, 0
      %p308 = por %p306, %p307
      %p309 = scmp.ne.s32.totalorder %s301, %s303
      %p310 = scmp.eq.s32.totalorder %s36, 1
      %p311 = por %p309, %p310
      %p312 = scmp.ne.s32.totalorder %s303, %s304
      %p313 = scmp.eq.s32.totalorder %s36, 0
      %p314 = por %p312, %p313
      %p315 = scmp.ne.s32.totalorder %s303, %s304
      %p316 = scmp.eq.s32.totalorder %s37, 1
      %p317 = por %p315, %p316
      %p319 = scmp.ne.s32.totalorder %s304, %s318
      %p320 = scmp.eq.s32.totalorder %s37, 0
      %p321 = por %p319, %p320
      %s323 = sadd.s32 %s322, 1
      %p326 = scmp.eq.s32.totalorder %s31, 1
      %p327 = scmp.ne.s32.totalorder %s322, %s324
      %p328 = scmp.eq.s32.totalorder %s31, 0
      %p329 = por %p327, %p328
      %p330 = scmp.ne.s32.totalorder %s322, %s324
      %p331 = scmp.eq.s32.totalorder %s36, 1
      %p332 = por %p330, %p331
      %p333 = scmp.ne.s32.totalorder %s324, %s325
      %p334 = scmp.eq.s32.totalorder %s36, 0
      %p335 = por %p333, %p334
      %p336 = scmp.ne.s32.totalorder %s324, %s325
      %p337 = scmp.eq.s32.totalorder %s37, 1
      %p338 = por %p336, %p337
      %p340 = scmp.ne.s32.totalorder %s325, %s339
      %p341 = scmp.eq.s32.totalorder %s37, 0
      %p342 = por %p340, %p341
      %s343 = ssub.s32 %s31, %s38
      %p344 = scmp.eq.s32.totalorder %s343, 0
      %s346 = sadd.s32 %s345, 1
      %s347 = scalar_select %p344, %s345, %s346
      %p350 = pneg %p344
      %p351 = scmp.eq.s32.totalorder %s31, 1
      %p352 = por %p350, %p351
      %p353 = scmp.ne.s32.totalorder %s345, %s348
      %p354 = scmp.eq.s32.totalorder %s31, 0
      %p355 = por %p353, %p354
      %p356 = scmp.ne.s32.totalorder %s345, %s348
      %p357 = scmp.eq.s32.totalorder %s36, 1
      %p358 = por %p356, %p357
      %p359 = scmp.ne.s32.totalorder %s348, %s349
      %p360 = scmp.eq.s32.totalorder %s36, 0
      %p361 = por %p359, %p360
      %p362 = scmp.ne.s32.totalorder %s348, %s349
      %p363 = scmp.eq.s32.totalorder %s37, 1
      %p364 = por %p362, %p363
      %p366 = scmp.ne.s32.totalorder %s349, %s365
      %p367 = scmp.eq.s32.totalorder %s37, 0
      %p368 = por %p366, %p367
      %p369 = scmp.le.s32.totalorder 1, %s31
      %p370 = scmp.lt.s32.totalorder %s31, 3
      %p371 = pnand %p369, %p370
      %p372 = pneg %p371
      // Predicated region
      $region9: #{transformer_block_forward.1} parent=5 // pred_check
        _
      $region10: #{transformer_block_forward.1} parent=5 // pred_check_branch
        %374 = sbr.rel (%p371) target = $region12
      $region11: #{transformer_block_forward.1} parent=5 // pred_region
        %s375 = ssub.s32 %s31, 1
        // Predicated region
        $region13: #{transformer_block_forward.1} parent=11 // pred_check
          %p376 = pneg %p104
        $region14: #{transformer_block_forward.1} parent=11 // pred_check_branch
          %378 = sbr.rel (%p376) target = $region16
        $region15: #{transformer_block_forward.1} parent=11 // pred_region
          %s380 = ssub.s32 16, 16
          %381 = vsyncadd [#allocation6], %s380
          %s383 = sshll.u32 [#allocation5], 4
          %s384 = int_to_ptr.vmem [resolvable:$true] %s383
          %386 = dma.hbm_to_vmem [thread:$0]  %s2, 16, %s384, [#allocation6]
        $region16: #{transformer_block_forward.1} parent=11 // pred_fallthru
          _
        // Predicated region
        $region17: #{transformer_block_forward.1} parent=11 // pred_check
          %p387 = pneg %p125
        $region18: #{transformer_block_forward.1} parent=11 // pred_check_branch
          %389 = sbr.rel (%p387) target = $region20
        $region19: #{transformer_block_forward.1} parent=11 // pred_region
          %s391 = ssub.s32 16, 16
          %392 = vsyncadd [#allocation6], %s391
          %s394 = sshll.u32 [#allocation7], 4
          %s395 = int_to_ptr.vmem [resolvable:$true] %s394
          %397 = dma.hbm_to_vmem [thread:$0]  %s3, 16, %s395, [#allocation6]
        $region20: #{transformer_block_forward.1} parent=11 // pred_fallthru
          _
        // Predicated region
        $region21: #{transformer_block_forward.1} parent=11 // pred_check
          %p398 = pneg %p146
        $region22: #{transformer_block_forward.1} parent=11 // pred_check_branch
          %400 = sbr.rel (%p398) target = $region24
        $region23: #{transformer_block_forward.1} parent=11 // pred_region
          _
        $region24: #{transformer_block_forward.1} parent=11 // pred_fallthru
          _
        // Predicated region
        $region25: #{transformer_block_forward.1} parent=11 // pred_check
          %p401 = pneg %p167
        $region26: #{transformer_block_forward.1} parent=11 // pred_check_branch
          %403 = sbr.rel (%p401) target = $region28
        $region27: #{transformer_block_forward.1} parent=11 // pred_region
          %s405 = ssub.s32 48, 48
          %406 = vsyncadd [#allocation9], %s405
          %s408 = sshll.u32 [#allocation8], 4
          %s409 = int_to_ptr.vmem [resolvable:$true] %s408
          %411 = dma.hbm_to_vmem [thread:$0]  %s5, 48, %s409, [#allocation9]
        $region28: #{transformer_block_forward.1} parent=11 // pred_fallthru
          _
        // Predicated region
        $region29: #{transformer_block_forward.1} parent=11 // pred_check
          %p412 = pneg %p188
        $region30: #{transformer_block_forward.1} parent=11 // pred_check_branch
          %414 = sbr.rel (%p412) target = $region32
        $region31: #{transformer_block_forward.1} parent=11 // pred_region
          %s416 = ssub.s32 1024, 1024
          %417 = vsyncadd [#allocation9], %s416
          %s418 = sshll.u32 [#allocation10], 4
          %s419 = int_to_ptr.vmem [resolvable:$true] %s418
          %424 = dma.hbm_to_vmem [thread:$0]  %s6, 1024, %s419, [#allocation9], 64, 64, 4
        $region32: #{transformer_block_forward.1} parent=11 // pred_fallthru
          _
        // Predicated region
        $region33: #{transformer_block_forward.1} parent=11 // pred_check
          %p425 = pneg %p209
        $region34: #{transformer_block_forward.1} parent=11 // pred_check_branch
          %427 = sbr.rel (%p425) target = $region36
        $region35: #{transformer_block_forward.1} parent=11 // pred_region
          %s429 = ssub.s32 16, 16
          %430 = vsyncadd [#allocation12], %s429
          %s432 = sshll.u32 [#allocation11], 4
          %s433 = int_to_ptr.vmem [resolvable:$true] %s432
          %435 = dma.hbm_to_vmem [thread:$0]  %s7, 16, %s433, [#allocation12]
        $region36: #{transformer_block_forward.1} parent=11 // pred_fallthru
          _
        // Predicated region
        $region37: #{transformer_block_forward.1} parent=11 // pred_check
          %p436 = pneg %p230
        $region38: #{transformer_block_forward.1} parent=11 // pred_check_branch
          %438 = sbr.rel (%p436) target = $region40
        $region39: #{transformer_block_forward.1} parent=11 // pred_region
          %s440 = ssub.s32 16, 16
          %441 = vsyncadd [#allocation12], %s440
          %s443 = sshll.u32 [#allocation13], 4
          %s444 = int_to_ptr.vmem [resolvable:$true] %s443
          %446 = dma.hbm_to_vmem [thread:$0]  %s8, 16, %s444, [#allocation12]
        $region40: #{transformer_block_forward.1} parent=11 // pred_fallthru
          _
        // Predicated region
        $region41: #{transformer_block_forward.1} parent=11 // pred_check
          %p447 = pneg %p251
        $region42: #{transformer_block_forward.1} parent=11 // pred_check_branch
          %449 = sbr.rel (%p447) target = $region44
        $region43: #{transformer_block_forward.1} parent=11 // pred_region
          %s451 = ssub.s32 16, 16
          %452 = vsyncadd [#allocation15], %s451
          %s454 = sshll.u32 [#allocation14], 4
          %s455 = int_to_ptr.vmem [resolvable:$true] %s454
          %457 = dma.hbm_to_vmem [thread:$0]  %s9, 16, %s455, [#allocation15]
        $region44: #{transformer_block_forward.1} parent=11 // pred_fallthru
          _
        // Predicated region
        $region45: #{transformer_block_forward.1} parent=11 // pred_check
          %p458 = pneg %p272
        $region46: #{transformer_block_forward.1} parent=11 // pred_check_branch
          %460 = sbr.rel (%p458) target = $region48
        $region47: #{transformer_block_forward.1} parent=11 // pred_region
          %s462 = ssub.s32 2048, 2048
          %463 = vsyncadd [#allocation15], %s462
          %s464 = sshll.u32 [#allocation16], 4
          %s465 = int_to_ptr.vmem [resolvable:$true] %s464
          %470 = dma.hbm_to_vmem [thread:$0]  %s10, 2048, %s465, [#allocation15], 128, 128, 8
        $region48: #{transformer_block_forward.1} parent=11 // pred_fallthru
          _
        // Predicated region
        $region49: #{transformer_block_forward.1} parent=11 // pred_check
          %p471 = pneg %p293
        $region50: #{transformer_block_forward.1} parent=11 // pred_check_branch
          %473 = sbr.rel (%p471) target = $region52
        $region51: #{transformer_block_forward.1} parent=11 // pred_region
          _
        $region52: #{transformer_block_forward.1} parent=11 // pred_fallthru
          _
        // Predicated region
        $region53: #{transformer_block_forward.1} parent=11 // pred_check
          %p474 = pneg %p314
        $region54: #{transformer_block_forward.1} parent=11 // pred_check_branch
          %476 = sbr.rel (%p474) target = $region56
        $region55: #{transformer_block_forward.1} parent=11 // pred_region
          %s478 = ssub.s32 2048, 2048
          %479 = vsyncadd [#allocation18], %s478
          %s480 = sshll.u32 [#allocation17], 4
          %s481 = int_to_ptr.vmem [resolvable:$true] %s480
          %486 = dma.hbm_to_vmem [thread:$0]  %s12, 2048, %s481, [#allocation18], 64, 64, 4
        $region56: #{transformer_block_forward.1} parent=11 // pred_fallthru
          _
        // Predicated region
        $region57: #{transformer_block_forward.1} parent=11 // pred_check
          %p487 = pneg %p335
        $region58: #{transformer_block_forward.1} parent=11 // pred_check_branch
          %489 = sbr.rel (%p487) target = $region60
        $region59: #{transformer_block_forward.1} parent=11 // pred_region
          %s491 = ssub.s32 16, 16
          %492 = vsyncadd [#allocation18], %s491
          %s494 = sshll.u32 [#allocation19], 4
          %s495 = int_to_ptr.vmem [resolvable:$true] %s494
          %497 = dma.hbm_to_vmem [thread:$0]  %s13, 16, %s495, [#allocation18]
        $region60: #{transformer_block_forward.1} parent=11 // pred_fallthru
          _
      $region12: #{transformer_block_forward.1} parent=5 // pred_fallthru
        _
      %p498 = scmp.lt.s32.totalorder %s31, 2
      // Predicated region
      $region61: #{transformer_block_forward.1} parent=5 // pred_check
        %p499 = pneg %p498
      $region62: #{transformer_block_forward.1} parent=5 // pred_check_branch
        %501 = sbr.rel (%p499) target = $region64
      $region63: #{transformer_block_forward.1} parent=5 // pred_region
        // Predicated region
        $region65: #{transformer_block_forward.1} parent=63 // pred_check
          %p502 = pneg %p51
        $region66: #{transformer_block_forward.1} parent=63 // pred_check_branch
          %504 = sbr.rel (%p502) target = $region68
        $region67: #{transformer_block_forward.1} parent=63 // pred_region
          %s505 = sand.u32 %s41, 1
          %s506 = scalar_lea.sflag [#allocation3], %s505
          %s507 = sand.u32 %s41, 1
          %s508 = smul.addr %s507, 8
          %s509 = scalar_lea.vmem [#allocation2], %s508
          %s511 = ssub.s32 128, 128
          %512 = vsyncadd %s506, %s511
          %s513 = smul.addr %s31, 128
          %s514 = scalar_lea.hbm %s0, %s513
          %s516 = sshll.u32 %s509, 4
          %s517 = int_to_ptr.vmem [resolvable:$true] %s516
          %519 = dma.hbm_to_vmem [thread:$0]  %s514, 128, %s517, %s506
        $region68: #{transformer_block_forward.1} parent=63 // pred_fallthru
          _
        // Predicated region
        $region69: #{transformer_block_forward.1} parent=63 // pred_check
          %p520 = pneg %p77
        $region70: #{transformer_block_forward.1} parent=63 // pred_check_branch
          %522 = sbr.rel (%p520) target = $region72
        $region71: #{transformer_block_forward.1} parent=63 // pred_region
          %p523 = scmp.lt.s32.totalorder %s31, 1
          %s524 = scalar_select %p523, %s31, 1
          %s525 = smul.addr %s524, 8
          %s526 = scalar_lea.vmem %s1, %s525
        $region72: #{transformer_block_forward.1} parent=63 // pred_fallthru
          _
      $region64: #{transformer_block_forward.1} parent=5 // pred_fallthru
        _
      %p527 = scmp.le.s32.totalorder 1, %s31
      %p528 = scmp.lt.s32.totalorder %s31, 3
      %p529 = pnand %p527, %p528
      %p530 = pneg %p529
      // Predicated region
      $region73: #{transformer_block_forward.1} parent=5 // pred_check
        _
      $region74: #{transformer_block_forward.1} parent=5 // pred_check_branch
        %532 = sbr.rel (%p529) target = $region76
      $region75: #{transformer_block_forward.1} parent=5 // pred_region
        %s533 = ssub.s32 %s31, 1
        %s534 = sand.u32 %s44, 1
        %s535 = scalar_lea.sflag [#allocation3], %s534
        %s536 = sand.u32 %s44, 1
        %s537 = smul.addr %s536, 8
        %s538 = scalar_lea.vmem [#allocation2], %s537
        // Predicated region
        $region77: #{transformer_block_forward.1} parent=75 // pred_check
          %p539 = pneg %p57
        $region78: #{transformer_block_forward.1} parent=75 // pred_check_branch
          %541 = sbr.rel (%p539) target = $region80
        $region79: #{transformer_block_forward.1} parent=75 // pred_region
          %542 = dma.done %s535, 128
        $region80: #{transformer_block_forward.1} parent=75 // pred_fallthru
          _
        // Predicated region
        $region81: #{transformer_block_forward.1} parent=75 // pred_check
          %p543 = pneg %p104
        $region82: #{transformer_block_forward.1} parent=75 // pred_check_branch
          %545 = sbr.rel (%p543) target = $region84
        $region83: #{transformer_block_forward.1} parent=75 // pred_region
          %546 = dma.done [#allocation6], 16
        $region84: #{transformer_block_forward.1} parent=75 // pred_fallthru
          _
        // Predicated region
        $region85: #{transformer_block_forward.1} parent=75 // pred_check
          %p547 = pneg %p125
        $region86: #{transformer_block_forward.1} parent=75 // pred_check_branch
          %549 = sbr.rel (%p547) target = $region88
        $region87: #{transformer_block_forward.1} parent=75 // pred_region
          %550 = dma.done [#allocation6], 16
        $region88: #{transformer_block_forward.1} parent=75 // pred_fallthru
          _
        // Predicated region
        $region89: #{transformer_block_forward.1} parent=75 // pred_check
          %p551 = pneg %p167
        $region90: #{transformer_block_forward.1} parent=75 // pred_check_branch
          %553 = sbr.rel (%p551) target = $region92
        $region91: #{transformer_block_forward.1} parent=75 // pred_region
          %554 = dma.done [#allocation9], 48
        $region92: #{transformer_block_forward.1} parent=75 // pred_fallthru
          _
        // Predicated region
        $region93: #{transformer_block_forward.1} parent=75 // pred_check
          %p555 = pneg %p188
        $region94: #{transformer_block_forward.1} parent=75 // pred_check_branch
          %557 = sbr.rel (%p555) target = $region96
        $region95: #{transformer_block_forward.1} parent=75 // pred_region
          %558 = dma.done [#allocation9], 1024
        $region96: #{transformer_block_forward.1} parent=75 // pred_fallthru
          _
        // Predicated region
        $region97: #{transformer_block_forward.1} parent=75 // pred_check
          %p559 = pneg %p209
        $region98: #{transformer_block_forward.1} parent=75 // pred_check_branch
          %561 = sbr.rel (%p559) target = $region100
        $region99: #{transformer_block_forward.1} parent=75 // pred_region
          %562 = dma.done [#allocation12], 16
        $region100: #{transformer_block_forward.1} parent=75 // pred_fallthru
          _
        // Predicated region
        $region101: #{transformer_block_forward.1} parent=75 // pred_check
          %p563 = pneg %p230
        $region102: #{transformer_block_forward.1} parent=75 // pred_check_branch
          %565 = sbr.rel (%p563) target = $region104
        $region103: #{transformer_block_forward.1} parent=75 // pred_region
          %566 = dma.done [#allocation12], 16
        $region104: #{transformer_block_forward.1} parent=75 // pred_fallthru
          _
        // Predicated region
        $region105: #{transformer_block_forward.1} parent=75 // pred_check
          %p567 = pneg %p251
        $region106: #{transformer_block_forward.1} parent=75 // pred_check_branch
          %569 = sbr.rel (%p567) target = $region108
        $region107: #{transformer_block_forward.1} parent=75 // pred_region
          %570 = dma.done [#allocation15], 16
        $region108: #{transformer_block_forward.1} parent=75 // pred_fallthru
          _
        // Predicated region
        $region109: #{transformer_block_forward.1} parent=75 // pred_check
          %p571 = pneg %p272
        $region110: #{transformer_block_forward.1} parent=75 // pred_check_branch
          %573 = sbr.rel (%p571) target = $region112
        $region111: #{transformer_block_forward.1} parent=75 // pred_region
          %574 = dma.done [#allocation15], 2048
        $region112: #{transformer_block_forward.1} parent=75 // pred_fallthru
          _
        // Predicated region
        $region113: #{transformer_block_forward.1} parent=75 // pred_check
          %p575 = pneg %p314
        $region114: #{transformer_block_forward.1} parent=75 // pred_check_branch
          %577 = sbr.rel (%p575) target = $region116
        $region115: #{transformer_block_forward.1} parent=75 // pred_region
          %578 = dma.done [#allocation18], 2048
        $region116: #{transformer_block_forward.1} parent=75 // pred_fallthru
          _
        // Predicated region
        $region117: #{transformer_block_forward.1} parent=75 // pred_check
          %p579 = pneg %p335
        $region118: #{transformer_block_forward.1} parent=75 // pred_check_branch
          %581 = sbr.rel (%p579) target = $region120
        $region119: #{transformer_block_forward.1} parent=75 // pred_region
          %582 = dma.done [#allocation18], 16
        $region120: #{transformer_block_forward.1} parent=75 // pred_fallthru
          _
        %s583 = sand.u32 %s44, 1
        %s584 = scalar_lea.sflag [#allocation3], %s583
        %s585 = sand.u32 %s44, 1
        %s586 = smul.addr %s585, 8
        %s587 = scalar_lea.vmem [#allocation2], %s586
        %p588 = pneg %p57
        %p589 = pneg %p54
        %p590 = scmp.lt.s32.totalorder %s36, 1
        %s591 = scalar_select %p590, %s36, 1
        %s592 = smul.addr %s591, 8
        %s593 = scalar_lea.vmem %s1, %s592
        %p594 = pneg %p83
        %p595 = pneg %p80
        %p596 = pneg %p104
        %p597 = pneg %p101
        %p598 = pneg %p125
        %p599 = pneg %p122
        %p600 = pneg %p146
        %p601 = pneg %p143
        %p602 = pneg %p167
        %p603 = pneg %p164
        %p604 = pneg %p188
        %p605 = pneg %p185
        %p606 = pneg %p209
        %p607 = pneg %p206
        %p608 = pneg %p230
        %p609 = pneg %p227
        %p610 = pneg %p251
        %p611 = pneg %p248
        %p612 = pneg %p272
        %p613 = pneg %p269
        %p614 = pneg %p293
        %p615 = pneg %p290
        %p616 = pneg %p314
        %p617 = pneg %p311
        %p618 = pneg %p335
        %p619 = pneg %p332
        %p620 = pneg %p361
        %p621 = pneg %p358
        %s622 = sand.u32 %s348, 1
        %s623 = scalar_lea.sflag [#allocation4], %s622
        %s624 = sand.u32 %s348, 1
        %s625 = smul.addr %s624, 8
        %s626 = scalar_lea.vmem [#allocation20], %s625
        %p627 = scmp.lt.s32.totalorder %s36, 1
        %s628 = scalar_select %p627, %s36, 1
        %s629 = smul.addr %s628, 8
        %s630 = scalar_lea.vmem %s1, %s629
        %v632 = vld [vmem:[%s538] sm:$0xff]
        %v633 = vld [vmem:[#allocation5] sm:$0x1]
        %v634 = vld [vmem:[#allocation7] sm:$0x1]
        %635 = vadd.xlane.f32.xlu0 %v632
        %v636 = vpop.xlane.xlu0 %635
        %v637 = vrcp.pop 128.0
        %v638 = vmul.f32 %v636, %v637
        %v639 = vsub.f32 %v632, %v638
        %v640 = vmul.f32 %v639, %v639
        %641 = vadd.xlane.f32.xlu0 %v640
        %v642 = vpop.xlane.xlu0 %641
        %v643 = vmul.f32 %v642, %v637
        %v644 = vadd.f32 %v643, 1e-06
        %v645 = vrsqrt.pop %v644
        %v646 = vmul.f32 %v639, %v645
        %v648 = vlaneseq
        %v649 = vshrl.u32 %v648, 7
        %v650 = vsub.s32 0, %v649
        %v651 = vrot.slane %v633, %v650
        %v653 = vmul.f32 %v646, %v651
        %v655 = vlaneseq
        %v656 = vshrl.u32 %v655, 7
        %v657 = vsub.s32 0, %v656
        %v658 = vrot.slane %v634, %v657
        %v660 = vadd.f32 %v653, %v658
        %v661 = vpack.c.bf16 %v660, %v660
        %v662 = vld [vmem:[%s4] sm:$0xff]
        %v663 = vld [vmem:[%s4 + $0x8] sm:$0xf]
        %v664 = vld [vmem:[%s4 + $0xc] sm:$0xff]
        %v665 = vld [vmem:[%s4 + $0x14] sm:$0xf]
        %v666 = vld [vmem:[%s4 + $0x18] sm:$0xff]
        %v667 = vld [vmem:[%s4 + $0x20] sm:$0xf]
        %v668 = vld [vmem:[%s4 + $0x24] sm:$0xff]
        %v669 = vld [vmem:[%s4 + $0x2c] sm:$0xf]
        %v670 = vld [vmem:[%s4 + $0x30] sm:$0xff]
        %v671 = vld [vmem:[%s4 + $0x38] sm:$0xf]
        %v672 = vld [vmem:[%s4 + $0x3c] sm:$0xff]
        %v673 = vld [vmem:[%s4 + $0x44] sm:$0xf]
        %v674 = vld [vmem:[%s4 + $0x48] sm:$0xff]
        %v675 = vld [vmem:[%s4 + $0x50] sm:$0xf]
        %v676 = vld [vmem:[%s4 + $0x54] sm:$0xff]
        %v677 = vld [vmem:[%s4 + $0x5c] sm:$0xf]
        %v678 = vld [vmem:[%s4 + $0x60] sm:$0xff]
        %v679 = vld [vmem:[%s4 + $0x68] sm:$0xf]
        %v680 = vld [vmem:[%s4 + $0x6c] sm:$0xff]
        %v681 = vld [vmem:[%s4 + $0x74] sm:$0xf]
        %v682 = vld [vmem:[%s4 + $0x78] sm:$0xff]
        %v683 = vld [vmem:[%s4 + $0x80] sm:$0xf]
        %v684 = vld [vmem:[%s4 + $0x84] sm:$0xff]
        %v685 = vld [vmem:[%s4 + $0x8c] sm:$0xf]
        %v686 = vld [vmem:[%s4 + $0x90] sm:$0xff]
        %v687 = vld [vmem:[%s4 + $0x98] sm:$0xf]
        %v688 = vld [vmem:[%s4 + $0x9c] sm:$0xff]
        %v689 = vld [vmem:[%s4 + $0xa4] sm:$0xf]
        %v690 = vld [vmem:[%s4 + $0xa8] sm:$0xff]
        %v691 = vld [vmem:[%s4 + $0xb0] sm:$0xf]
        %v692 = vld [vmem:[%s4 + $0xb4] sm:$0xff]
        %v693 = vld [vmem:[%s4 + $0xbc] sm:$0xf]
        %v694 = vld [vmem:[#allocation8] sm:$0x7]
        %v696 = vlaneseq
        %v697 = vshrl.u32 %v696, 7
        %v698 = vsub.s32 0, %v697
        %v699 = vrot.slane %v694, %v698
        %v700 = vlaneseq
        %v701 = vshrl.u32 %v700, 7
        %v702 = vsub.s32 1, %v701
        %v703 = vrot.slane %v694, %v702
        %v704 = vlaneseq
        %v705 = vshrl.u32 %v704, 7
        %v706 = vsub.s32 2, %v705
        %v707 = vrot.slane %v694, %v706
        %v743 = vunpack.c.l.b16 %v662
        %v744 = vunpack.c.h.b16 %v662
        %v745 = vunpack.c.l.b16 %v663
        %v746 = vunpack.c.l.b16 %v664
        %v747 = vunpack.c.h.b16 %v664
        %v748 = vunpack.c.l.b16 %v665
        %v749 = vunpack.c.l.b16 %v666
        %v750 = vunpack.c.h.b16 %v666
        %v751 = vunpack.c.l.b16 %v667
        %v752 = vunpack.c.l.b16 %v668
        %v753 = vunpack.c.h.b16 %v668
        %v754 = vunpack.c.l.b16 %v669
        %v755 = vunpack.c.l.b16 %v670
        %v756 = vunpack.c.h.b16 %v670
        %v757 = vunpack.c.l.b16 %v671
        %v758 = vunpack.c.l.b16 %v672
        %v759 = vunpack.c.h.b16 %v672
        %v760 = vunpack.c.l.b16 %v673
        %v761 = vunpack.c.l.b16 %v674
        %v762 = vunpack.c.h.b16 %v674
        %v763 = vunpack.c.l.b16 %v675
        %v764 = vunpack.c.l.b16 %v676
        %v765 = vunpack.c.h.b16 %v676
        %v766 = vunpack.c.l.b16 %v677
        %v767 = vunpack.c.l.b16 %v678
        %v768 = vunpack.c.h.b16 %v678
        %v769 = vunpack.c.l.b16 %v679
        %v770 = vunpack.c.l.b16 %v680
        %v771 = vunpack.c.h.b16 %v680
        %v772 = vunpack.c.l.b16 %v681
        %v773 = vunpack.c.l.b16 %v682
        %v774 = vunpack.c.h.b16 %v682
        %v775 = vunpack.c.l.b16 %v683
        %v776 = vunpack.c.l.b16 %v684
        %v777 = vunpack.c.h.b16 %v684
        %v778 = vunpack.c.l.b16 %v685
        %v779 = vunpack.c.l.b16 %v686
        %v780 = vunpack.c.h.b16 %v686
        %v781 = vunpack.c.l.b16 %v687
        %v782 = vunpack.c.l.b16 %v688
        %v783 = vunpack.c.h.b16 %v688
        %v784 = vunpack.c.l.b16 %v689
        %v785 = vunpack.c.l.b16 %v690
        %v786 = vunpack.c.h.b16 %v690
        %v787 = vunpack.c.l.b16 %v691
        %v788 = vunpack.c.l.b16 %v692
        %v789 = vunpack.c.h.b16 %v692
        %v790 = vunpack.c.l.b16 %v693
        %v791 = vpack.c.b16 %v746, %v743
        %v792 = vpack.c.b16 %v747, %v744
        %v793 = vpack.c.b16 %v748, %v745
        %v794 = vpack.c.b16 %v752, %v749
        %v795 = vpack.c.b16 %v753, %v750
        %v796 = vpack.c.b16 %v754, %v751
        %v797 = vpack.c.b16 %v758, %v755
        %v798 = vpack.c.b16 %v759, %v756
        %v799 = vpack.c.b16 %v760, %v757
        %v800 = vpack.c.b16 %v764, %v761
        %v801 = vpack.c.b16 %v765, %v762
        %v802 = vpack.c.b16 %v766, %v763
        %v803 = vpack.c.b16 %v770, %v767
        %v804 = vpack.c.b16 %v771, %v768
        %v805 = vpack.c.b16 %v772, %v769
        %v806 = vpack.c.b16 %v776, %v773
        %v807 = vpack.c.b16 %v777, %v774
        %v808 = vpack.c.b16 %v778, %v775
        %v809 = vpack.c.b16 %v782, %v779
        %v810 = vpack.c.b16 %v783, %v780
        %v811 = vpack.c.b16 %v784, %v781
        %v812 = vpack.c.b16 %v788, %v785
        %v813 = vpack.c.b16 %v789, %v786
        %v814 = vpack.c.b16 %v790, %v787
        %839 = vmatprep.subr.bf16.mxu0 %v792
        %840 = vmatpush1.bf16.msra.mxu0 %v791
        %841 = vmatprep.subr.bf16.mxu0 %v795
        %842 = vmatpush1.bf16.msra.mxu0 %v794
        %843 = vmatprep.subr.bf16.mxu0 %v798
        %844 = vmatpush1.bf16.msra.mxu0 %v797
        %845 = vmatprep.subr.bf16.mxu0 %v801
        %846 = vmatpush1.bf16.msra.mxu0 %v800
        %847 = vmatprep.subr.bf16.mxu0 %v804
        %848 = vmatpush1.bf16.msra.mxu0 %v803
        %849 = vmatprep.subr.bf16.mxu0 %v807
        %850 = vmatpush1.bf16.msra.mxu0 %v806
        %851 = vmatprep.subr.bf16.mxu0 %v810
        %852 = vmatpush1.bf16.msra.mxu0 %v809
        %853 = vmatprep.subr.bf16.mxu0 %v813
        %854 = vmatpush1.bf16.msra.mxu0 %v812
        %855 = vmatprep.subr.bf16.mxu0 0
        %856 = vmatpush1.bf16.msra.mxu0 0
        %857 = vmatprep.subr.bf16.mxu0 0
        %858 = vmatpush1.bf16.msra.mxu0 0
        %859 = vmatprep.subr.bf16.mxu0 0
        %860 = vmatpush1.bf16.msra.mxu0 0
        %861 = vmatprep.subr.bf16.mxu0 0
        %862 = vmatpush1.bf16.msra.mxu0 0
        %863 = vmatprep.subr.bf16.mxu0 0
        %864 = vmatpush1.bf16.msra.mxu0 0
        %865 = vmatprep.subr.bf16.mxu0 0
        %866 = vmatpush1.bf16.msra.mxu0 0
        %867 = vmatprep.subr.bf16.mxu0 0
        %868 = vmatpush1.bf16.msra.mxu0 0
        %869 = vmatprep.subr.bf16.mxu0 0
        %870 = vmatpush1.bf16.msra.mxu0 0
        %871 = vmatprep.mubr.bf16.mxu0 0
        %872 = vmatmul.mubr.bf16.gmra.mrb[0].mxu0 %v661
        %v873 = vpop.f32.mrb[0].mxu0
        %v874 = vadd.f32 %v699, %v873
        %v875 = vpop.f32.mrb[0].mxu0
        %v876 = vadd.f32 %v703, %v875
        %v877 = vpop.f32.mrb[0].mxu0
        %v878 = vpop.f32.mrb[0].mxu0
        %879 = vdwg.mxu0
        %880 = vmatprep.subr.bf16.mxu0 0
        %881 = vmatpush1.bf16.msra.mxu0 %v793
        %882 = vmatprep.subr.bf16.mxu0 0
        %883 = vmatpush1.bf16.msra.mxu0 %v796
        %884 = vmatprep.subr.bf16.mxu0 0
        %885 = vmatpush1.bf16.msra.mxu0 %v799
        %886 = vmatprep.subr.bf16.mxu0 0
        %887 = vmatpush1.bf16.msra.mxu0 %v802
        %888 = vmatprep.subr.bf16.mxu0 0
        %889 = vmatpush1.bf16.msra.mxu0 %v805
        %890 = vmatprep.subr.bf16.mxu0 0
        %891 = vmatpush1.bf16.msra.mxu0 %v808
        %892 = vmatprep.subr.bf16.mxu0 0
        %893 = vmatpush1.bf16.msra.mxu0 %v811
        %894 = vmatprep.subr.bf16.mxu0 0
        %895 = vmatpush1.bf16.msra.mxu0 %v814
        %896 = vmatprep.subr.bf16.mxu0 0
        %897 = vmatpush1.bf16.msra.mxu0 0
        %898 = vmatprep.subr.bf16.mxu0 0
        %899 = vmatpush1.bf16.msra.mxu0 0
        %900 = vmatprep.subr.bf16.mxu0 0
        %901 = vmatpush1.bf16.msra.mxu0 0
        %902 = vmatprep.subr.bf16.mxu0 0
        %903 = vmatpush1.bf16.msra.mxu0 0
        %904 = vmatprep.subr.bf16.mxu0 0
        %905 = vmatpush1.bf16.msra.mxu0 0
        %906 = vmatprep.subr.bf16.mxu0 0
        %907 = vmatpush1.bf16.msra.mxu0 0
        %908 = vmatprep.subr.bf16.mxu0 0
        %909 = vmatpush1.bf16.msra.mxu0 0
        %910 = vmatprep.subr.bf16.mxu0 0
        %911 = vmatpush1.bf16.msra.mxu0 0
        %912 = vmatprep.mubr.bf16.mxu0 0
        %913 = vmatmul.mubr.bf16.gmra.mrb[0].mxu0 %v661
        %v914 = vpop.f32.mrb[0].mxu0
        %v915 = vadd.f32 %v707, %v914
        %v916 = vpop.f32.mrb[0].mxu0
        %v917 = vpop.f32.mrb[0].mxu0
        %v918 = vpop.f32.mrb[0].mxu0
        %919 = vdwg.mxu0
        %v920 = vpack.c.bf16 %v874, %v874
        %v921 = vpack.c.bf16 %v876, %v876
        %v922 = vpack.c.bf16 %v915, %v915
        %v923 = vld [vmem:[%s630] sm:$0xff]
        %vm924 = vcmask 261120
        %v926 = vsel %vm924, %v920, 0
        %v929 = vsel %vm924, %v921, 0
        %931 = vmatprep.subr.bf16.mxu0 0
        %932 = vmatpush1.bf16.xpose.msra.mxu0 %v929
        %933 = vmatprep.subr.bf16.mxu0 0
        %934 = vmatpush1.bf16.xpose.msra.mxu0 0
        %935 = vmatprep.subr.bf16.mxu0 0
        %936 = vmatpush1.bf16.xpose.msra.mxu0 0
        %937 = vmatprep.subr.bf16.mxu0 0
        %938 = vmatpush1.bf16.xpose.msra.mxu0 0
        %939 = vmatprep.subr.bf16.mxu0 0
        %940 = vmatpush1.bf16.xpose.msra.mxu0 0
        %941 = vmatprep.subr.bf16.mxu0 0
        %942 = vmatpush1.bf16.xpose.msra.mxu0 0
        %943 = vmatprep.subr.bf16.mxu0 0
        %944 = vmatpush1.bf16.xpose.msra.mxu0 0
        %945 = vmatprep.subr.bf16.mxu0 0
        %946 = vmatpush1.bf16.xpose.msra.mxu0 0
        %947 = vmatprep.subr.bf16.mxu0 0
        %948 = vmatpush1.bf16.xpose.msra.mxu0 0
        %949 = vmatprep.subr.bf16.mxu0 0
        %950 = vmatpush1.bf16.xpose.msra.mxu0 0
        %951 = vmatprep.subr.bf16.mxu0 0
        %952 = vmatpush1.bf16.xpose.msra.mxu0 0
        %953 = vmatprep.subr.bf16.mxu0 0
        %954 = vmatpush1.bf16.xpose.msra.mxu0 0
        %955 = vmatprep.subr.bf16.mxu0 0
        %956 = vmatpush1.bf16.xpose.msra.mxu0 0
        %957 = vmatprep.subr.bf16.mxu0 0
        %958 = vmatpush1.bf16.xpose.msra.mxu0 0
        %959 = vmatprep.subr.bf16.mxu0 0
        %960 = vmatpush1.bf16.xpose.msra.mxu0 0
        %961 = vmatprep.subr.bf16.mxu0 0
        %962 = vmatpush1.bf16.xpose.msra.mxu0 0
        %963 = vmatprep.mubr.bf16.mxu0 0
        %964 = vmatmul.mubr.bf16.gmra.mrb[0].mxu0 %v926
        %v965 = vpop.f32.mrb[0].mxu0
        %v966 = vadd.f32 %v923, %v965
        %v967 = vpop.f32.mrb[0].mxu0
        %v968 = vpop.f32.mrb[0].mxu0
        %v969 = vpop.f32.mrb[0].mxu0
        %970 = vdwg.mxu0
        %vm971 = vcmask 64512
        %v972 = vsel %vm971, %v966, -inf
        %973 = vmax.xlane.f32.xlu0 %v972
        %v974 = vpop.xlane.xlu0 %973
        %v975 = vsub.f32 %v966, %v974
        %v976 = vmul.f32 %v975, 1.442695
        %v977 = vpow.pop %v976
        %v978 = vsel %vm971, %v977, 0.0
        %979 = vadd.xlane.f32.xlu0 %v978
        %v980 = vpop.xlane.xlu0 %979
        %v981 = vrcp.pop %v980
        %v982 = vmul.f32 %v977, %v981
        %v983 = vpack.c.bf16 %v982, %v982
        %v985 = vsel %vm971, %v983, 0
        %vm987 = vcmask 1043456
        %v989 = vsel %vm987, %v922, 0
        %991 = vmatprep.subr.bf16.mxu0 0
        %992 = vmatpush1.bf16.msra.mxu0 %v989
        %993 = vmatprep.subr.bf16.mxu0 0
        %994 = vmatpush1.bf16.msra.mxu0 0
        %995 = vmatprep.subr.bf16.mxu0 0
        %996 = vmatpush1.bf16.msra.mxu0 0
        %997 = vmatprep.subr.bf16.mxu0 0
        %998 = vmatpush1.bf16.msra.mxu0 0
        %999 = vmatprep.subr.bf16.mxu0 0
        %1000 = vmatpush1.bf16.msra.mxu0 0
        %1001 = vmatprep.subr.bf16.mxu0 0
        %1002 = vmatpush1.bf16.msra.mxu0 0
        %1003 = vmatprep.subr.bf16.mxu0 0
        %1004 = vmatpush1.bf16.msra.mxu0 0
        %1005 = vmatprep.subr.bf16.mxu0 0
        %1006 = vmatpush1.bf16.msra.mxu0 0
        %1007 = vmatprep.subr.bf16.mxu0 0
        %1008 = vmatpush1.bf16.msra.mxu0 0
        %1009 = vmatprep.subr.bf16.mxu0 0
        %1010 = vmatpush1.bf16.msra.mxu0 0
        %1011 = vmatprep.subr.bf16.mxu0 0
        %1012 = vmatpush1.bf16.msra.mxu0 0
        %1013 = vmatprep.subr.bf16.mxu0 0
        %1014 = vmatpush1.bf16.msra.mxu0 0
        %1015 = vmatprep.subr.bf16.mxu0 0
        %1016 = vmatpush1.bf16.msra.mxu0 0
        %1017 = vmatprep.subr.bf16.mxu0 0
        %1018 = vmatpush1.bf16.msra.mxu0 0
        %1019 = vmatprep.subr.bf16.mxu0 0
        %1020 = vmatpush1.bf16.msra.mxu0 0
        %1021 = vmatprep.subr.bf16.mxu0 0
        %1022 = vmatpush1.bf16.msra.mxu0 0
        %1023 = vmatprep.mubr.bf16.mxu0 0
        %1024 = vmatmul.mubr.bf16.gmra.mrb[0].mxu0 %v985
        %v1025 = vpop.f32.mrb[0].mxu0
        %v1026 = vadd.f32 0.0, %v1025
        %v1027 = vpop.f32.mrb[0].mxu0
        %v1028 = vpop.f32.mrb[0].mxu0
        %v1029 = vpop.f32.mrb[0].mxu0
        %1030 = vdwg.mxu0
        %1032 = vrot.lane.b32.xlu0 %v920, 96
        %v1033 = vpop.permute.xlu0 %1032
        %1035 = vrot.lane.b32.xlu0 %v921, 96
        %v1036 = vpop.permute.xlu0 %1035
        %v1038 = vsel %vm924, %v1033, 0
        %v1041 = vsel %vm924, %v1036, 0
        %1043 = vmatprep.subr.bf16.mxu0 0
        %1044 = vmatpush1.bf16.xpose.msra.mxu0 %v1041
        %1045 = vmatprep.subr.bf16.mxu0 0
        %1046 = vmatpush1.bf16.xpose.msra.mxu0 0
        %1047 = vmatprep.subr.bf16.mxu0 0
        %1048 = vmatpush1.bf16.xpose.msra.mxu0 0
        %1049 = vmatprep.subr.bf16.mxu0 0
        %1050 = vmatpush1.bf16.xpose.msra.mxu0 0
        %1051 = vmatprep.subr.bf16.mxu0 0
        %1052 = vmatpush1.bf16.xpose.msra.mxu0 0
        %1053 = vmatprep.subr.bf16.mxu0 0
        %1054 = vmatpush1.bf16.xpose.msra.mxu0 0
        %1055 = vmatprep.subr.bf16.mxu0 0
        %1056 = vmatpush1.bf16.xpose.msra.mxu0 0
        %1057 = vmatprep.subr.bf16.mxu0 0
        %1058 = vmatpush1.bf16.xpose.msra.mxu0 0
        %1059 = vmatprep.subr.bf16.mxu0 0
        %1060 = vmatpush1.bf16.xpose.msra.mxu0 0
        %1061 = vmatprep.subr.bf16.mxu0 0
        %1062 = vmatpush1.bf16.xpose.msra.mxu0 0
        %1063 = vmatprep.subr.bf16.mxu0 0
        %1064 = vmatpush1.bf16.xpose.msra.mxu0 0
        %1065 = vmatprep.subr.bf16.mxu0 0
        %1066 = vmatpush1.bf16.xpose.msra.mxu0 0
        %1067 = vmatprep.subr.bf16.mxu0 0
        %1068 = vmatpush1.bf16.xpose.msra.mxu0 0
        %1069 = vmatprep.subr.bf16.mxu0 0
        %1070 = vmatpush1.bf16.xpose.msra.mxu0 0
        %1071 = vmatprep.subr.bf16.mxu0 0
        %1072 = vmatpush1.bf16.xpose.msra.mxu0 0
        %1073 = vmatprep.subr.bf16.mxu0 0
        %1074 = vmatpush1.bf16.xpose.msra.mxu0 0
        %1075 = vmatprep.mubr.bf16.mxu0 0
        %1076 = vmatmul.mubr.bf16.gmra.mrb[0].mxu0 %v1038
        %v1077 = vpop.f32.mrb[0].mxu0
        %v1078 = vadd.f32 %v923, %v1077
        %v1079 = vpop.f32.mrb[0].mxu0
        %v1080 = vpop.f32.mrb[0].mxu0
        %v1081 = vpop.f32.mrb[0].mxu0
        %1082 = vdwg.mxu0
        %v1083 = vsel %vm971, %v1078, -inf
        %1084 = vmax.xlane.f32.xlu0 %v1083
        %v1085 = vpop.xlane.xlu0 %1084
        %v1086 = vsub.f32 %v1078, %v1085
        %v1087 = vmul.f32 %v1086, 1.442695
        %v1088 = vpow.pop %v1087
        %v1089 = vsel %vm971, %v1088, 0.0
        %1090 = vadd.xlane.f32.xlu0 %v1089
        %v1091 = vpop.xlane.xlu0 %1090
        %v1092 = vrcp.pop %v1091
        %v1093 = vmul.f32 %v1088, %v1092
        %v1094 = vpack.c.bf16 %v1093, %v1093
        %1096 = vrot.lane.b32.xlu0 %v922, 96
        %v1097 = vpop.permute.xlu0 %1096
        %v1099 = vsel %vm971, %v1094, 0
        %v1102 = vsel %vm987, %v1097, 0
        %1104 = vmatprep.subr.bf16.mxu0 0
        %1105 = vmatpush1.bf16.msra.mxu0 %v1102
        %1106 = vmatprep.subr.bf16.mxu0 0
        %1107 = vmatpush1.bf16.msra.mxu0 0
        %1108 = vmatprep.subr.bf16.mxu0 0
        %1109 = vmatpush1.bf16.msra.mxu0 0
        %1110 = vmatprep.subr.bf16.mxu0 0
        %1111 = vmatpush1.bf16.msra.mxu0 0
        %1112 = vmatprep.subr.bf16.mxu0 0
        %1113 = vmatpush1.bf16.msra.mxu0 0
        %1114 = vmatprep.subr.bf16.mxu0 0
        %1115 = vmatpush1.bf16.msra.mxu0 0
        %1116 = vmatprep.subr.bf16.mxu0 0
        %1117 = vmatpush1.bf16.msra.mxu0 0
        %1118 = vmatprep.subr.bf16.mxu0 0
        %1119 = vmatpush1.bf16.msra.mxu0 0
        %1120 = vmatprep.subr.bf16.mxu0 0
        %1121 = vmatpush1.bf16.msra.mxu0 0
        %1122 = vmatprep.subr.bf16.mxu0 0
        %1123 = vmatpush1.bf16.msra.mxu0 0
        %1124 = vmatprep.subr.bf16.mxu0 0
        %1125 = vmatpush1.bf16.msra.mxu0 0
        %1126 = vmatprep.subr.bf16.mxu0 0
        %1127 = vmatpush1.bf16.msra.mxu0 0
        %1128 = vmatprep.subr.bf16.mxu0 0
        %1129 = vmatpush1.bf16.msra.mxu0 0
        %1130 = vmatprep.subr.bf16.mxu0 0
        %1131 = vmatpush1.bf16.msra.mxu0 0
        %1132 = vmatprep.subr.bf16.mxu0 0
        %1133 = vmatpush1.bf16.msra.mxu0 0
        %1134 = vmatprep.subr.bf16.mxu0 0
        %1135 = vmatpush1.bf16.msra.mxu0 0
        %1136 = vmatprep.mubr.bf16.mxu0 0
        %1137 = vmatmul.mubr.bf16.gmra.mrb[0].mxu0 %v1099
        %v1138 = vpop.f32.mrb[0].mxu0
        %v1139 = vadd.f32 0.0, %v1138
        %v1140 = vpop.f32.mrb[0].mxu0
        %v1141 = vpop.f32.mrb[0].mxu0
        %v1142 = vpop.f32.mrb[0].mxu0
        %1143 = vdwg.mxu0
        %1144 = vrot.lane.b32.xlu0 %v920, 64
        %v1145 = vpop.permute.xlu0 %1144
        %1146 = vrot.lane.b32.xlu0 %v921, 64
        %v1147 = vpop.permute.xlu0 %1146
        %v1149 = vsel %vm924, %v1145, 0
        %v1152 = vsel %vm924, %v1147, 0
        %1154 = vmatprep.subr.bf16.mxu0 0
        %1155 = vmatpush1.bf16.xpose.msra.mxu0 %v1152
        %1156 = vmatprep.subr.bf16.mxu0 0
        %1157 = vmatpush1.bf16.xpose.msra.mxu0 0
        %1158 = vmatprep.subr.bf16.mxu0 0
        %1159 = vmatpush1.bf16.xpose.msra.mxu0 0
        %1160 = vmatprep.subr.bf16.mxu0 0
        %1161 = vmatpush1.bf16.xpose.msra.mxu0 0
        %1162 = vmatprep.subr.bf16.mxu0 0
        %1163 = vmatpush1.bf16.xpose.msra.mxu0 0
        %1164 = vmatprep.subr.bf16.mxu0 0
        %1165 = vmatpush1.bf16.xpose.msra.mxu0 0
        %1166 = vmatprep.subr.bf16.mxu0 0
        %1167 = vmatpush1.bf16.xpose.msra.mxu0 0
        %1168 = vmatprep.subr.bf16.mxu0 0
        %1169 = vmatpush1.bf16.xpose.msra.mxu0 0
        %1170 = vmatprep.subr.bf16.mxu0 0
        %1171 = vmatpush1.bf16.xpose.msra.mxu0 0
        %1172 = vmatprep.subr.bf16.mxu0 0
        %1173 = vmatpush1.bf16.xpose.msra.mxu0 0
        %1174 = vmatprep.subr.bf16.mxu0 0
        %1175 = vmatpush1.bf16.xpose.msra.mxu0 0
        %1176 = vmatprep.subr.bf16.mxu0 0
        %1177 = vmatpush1.bf16.xpose.msra.mxu0 0
        %1178 = vmatprep.subr.bf16.mxu0 0
        %1179 = vmatpush1.bf16.xpose.msra.mxu0 0
        %1180 = vmatprep.subr.bf16.mxu0 0
        %1181 = vmatpush1.bf16.xpose.msra.mxu0 0
        %1182 = vmatprep.subr.bf16.mxu0 0
        %1183 = vmatpush1.bf16.xpose.msra.mxu0 0
        %1184 = vmatprep.subr.bf16.mxu0 0
        %1185 = vmatpush1.bf16.xpose.msra.mxu0 0
        %1186 = vmatprep.mubr.bf16.mxu0 0
        %1187 = vmatmul.mubr.bf16.gmra.mrb[0].mxu0 %v1149
        %v1188 = vpop.f32.mrb[0].mxu0
        %v1189 = vadd.f32 %v923, %v1188
        %v1190 = vpop.f32.mrb[0].mxu0
        %v1191 = vpop.f32.mrb[0].mxu0
        %v1192 = vpop.f32.mrb[0].mxu0
        %1193 = vdwg.mxu0
        %v1194 = vsel %vm971, %v1189, -inf
        %1195 = vmax.xlane.f32.xlu0 %v1194
        %v1196 = vpop.xlane.xlu0 %1195
        %v1197 = vsub.f32 %v1189, %v1196
        %v1198 = vmul.f32 %v1197, 1.442695
        %v1199 = vpow.pop %v1198
        %v1200 = vsel %vm971, %v1199, 0.0
        %1201 = vadd.xlane.f32.xlu0 %v1200
        %v1202 = vpop.xlane.xlu0 %1201
        %v1203 = vrcp.pop %v1202
        %v1204 = vmul.f32 %v1199, %v1203
        %v1205 = vpack.c.bf16 %v1204, %v1204
        %1206 = vrot.lane.b32.xlu0 %v922, 64
        %v1207 = vpop.permute.xlu0 %1206
        %v1209 = vsel %vm971, %v1205, 0
        %v1212 = vsel %vm987, %v1207, 0
        %1214 = vmatprep.subr.bf16.mxu0 0
        %1215 = vmatpush1.bf16.msra.mxu0 %v1212
        %1216 = vmatprep.subr.bf16.mxu0 0
        %1217 = vmatpush1.bf16.msra.mxu0 0
        %1218 = vmatprep.subr.bf16.mxu0 0
        %1219 = vmatpush1.bf16.msra.mxu0 0
        %1220 = vmatprep.subr.bf16.mxu0 0
        %1221 = vmatpush1.bf16.msra.mxu0 0
        %1222 = vmatprep.subr.bf16.mxu0 0
        %1223 = vmatpush1.bf16.msra.mxu0 0
        %1224 = vmatprep.subr.bf16.mxu0 0
        %1225 = vmatpush1.bf16.msra.mxu0 0
        %1226 = vmatprep.subr.bf16.mxu0 0
        %1227 = vmatpush1.bf16.msra.mxu0 0
        %1228 = vmatprep.subr.bf16.mxu0 0
        %1229 = vmatpush1.bf16.msra.mxu0 0
        %1230 = vmatprep.subr.bf16.mxu0 0
        %1231 = vmatpush1.bf16.msra.mxu0 0
        %1232 = vmatprep.subr.bf16.mxu0 0
        %1233 = vmatpush1.bf16.msra.mxu0 0
        %1234 = vmatprep.subr.bf16.mxu0 0
        %1235 = vmatpush1.bf16.msra.mxu0 0
        %1236 = vmatprep.subr.bf16.mxu0 0
        %1237 = vmatpush1.bf16.msra.mxu0 0
        %1238 = vmatprep.subr.bf16.mxu0 0
        %1239 = vmatpush1.bf16.msra.mxu0 0
        %1240 = vmatprep.subr.bf16.mxu0 0
        %1241 = vmatpush1.bf16.msra.mxu0 0
        %1242 = vmatprep.subr.bf16.mxu0 0
        %1243 = vmatpush1.bf16.msra.mxu0 0
        %1244 = vmatprep.subr.bf16.mxu0 0
        %1245 = vmatpush1.bf16.msra.mxu0 0
        %1246 = vmatprep.mubr.bf16.mxu0 0
        %1247 = vmatmul.mubr.bf16.gmra.mrb[0].mxu0 %v1209
        %v1248 = vpop.f32.mrb[0].mxu0
        %v1249 = vadd.f32 0.0, %v1248
        %v1250 = vpop.f32.mrb[0].mxu0
        %v1251 = vpop.f32.mrb[0].mxu0
        %v1252 = vpop.f32.mrb[0].mxu0
        %1253 = vdwg.mxu0
        %1254 = vrot.lane.b32.xlu0 %v920, 32
        %v1255 = vpop.permute.xlu0 %1254
        %1256 = vrot.lane.b32.xlu0 %v921, 32
        %v1257 = vpop.permute.xlu0 %1256
        %v1259 = vsel %vm924, %v1255, 0
        %v1262 = vsel %vm924, %v1257, 0
        %1264 = vmatprep.subr.bf16.mxu0 0
        %1265 = vmatpush1.bf16.xpose.msra.mxu0 %v1262
        %1266 = vmatprep.subr.bf16.mxu0 0
        %1267 = vmatpush1.bf16.xpose.msra.mxu0 0
        %1268 = vmatprep.subr.bf16.mxu0 0
        %1269 = vmatpush1.bf16.xpose.msra.mxu0 0
        %1270 = vmatprep.subr.bf16.mxu0 0
        %1271 = vmatpush1.bf16.xpose.msra.mxu0 0
        %1272 = vmatprep.subr.bf16.mxu0 0
        %1273 = vmatpush1.bf16.xpose.msra.mxu0 0
        %1274 = vmatprep.subr.bf16.mxu0 0
        %1275 = vmatpush1.bf16.xpose.msra.mxu0 0
        %1276 = vmatprep.subr.bf16.mxu0 0
        %1277 = vmatpush1.bf16.xpose.msra.mxu0 0
        %1278 = vmatprep.subr.bf16.mxu0 0
        %1279 = vmatpush1.bf16.xpose.msra.mxu0 0
        %1280 = vmatprep.subr.bf16.mxu0 0
        %1281 = vmatpush1.bf16.xpose.msra.mxu0 0
        %1282 = vmatprep.subr.bf16.mxu0 0
        %1283 = vmatpush1.bf16.xpose.msra.mxu0 0
        %1284 = vmatprep.subr.bf16.mxu0 0
        %1285 = vmatpush1.bf16.xpose.msra.mxu0 0
        %1286 = vmatprep.subr.bf16.mxu0 0
        %1287 = vmatpush1.bf16.xpose.msra.mxu0 0
        %1288 = vmatprep.subr.bf16.mxu0 0
        %1289 = vmatpush1.bf16.xpose.msra.mxu0 0
        %1290 = vmatprep.subr.bf16.mxu0 0
        %1291 = vmatpush1.bf16.xpose.msra.mxu0 0
        %1292 = vmatprep.subr.bf16.mxu0 0
        %1293 = vmatpush1.bf16.xpose.msra.mxu0 0
        %1294 = vmatprep.subr.bf16.mxu0 0
        %1295 = vmatpush1.bf16.xpose.msra.mxu0 0
        %1296 = vmatprep.mubr.bf16.mxu0 0
        %1297 = vmatmul.mubr.bf16.gmra.mrb[0].mxu0 %v1259
        %v1298 = vpop.f32.mrb[0].mxu0
        %v1299 = vadd.f32 %v923, %v1298
        %v1300 = vpop.f32.mrb[0].mxu0
        %v1301 = vpop.f32.mrb[0].mxu0
        %v1302 = vpop.f32.mrb[0].mxu0
        %1303 = vdwg.mxu0
        %v1304 = vsel %vm971, %v1299, -inf
        %1305 = vmax.xlane.f32.xlu0 %v1304
        %v1306 = vpop.xlane.xlu0 %1305
        %v1307 = vsub.f32 %v1299, %v1306
        %v1308 = vmul.f32 %v1307, 1.442695
        %v1309 = vpow.pop %v1308
        %v1310 = vsel %vm971, %v1309, 0.0
        %1311 = vadd.xlane.f32.xlu0 %v1310
        %v1312 = vpop.xlane.xlu0 %1311
        %v1313 = vrcp.pop %v1312
        %v1314 = vmul.f32 %v1309, %v1313
        %v1315 = vpack.c.bf16 %v1314, %v1314
        %1316 = vrot.lane.b32.xlu0 %v922, 32
        %v1317 = vpop.permute.xlu0 %1316
        %v1319 = vsel %vm971, %v1315, 0
        %v1322 = vsel %vm987, %v1317, 0
        %1324 = vmatprep.subr.bf16.mxu0 0
        %1325 = vmatpush1.bf16.msra.mxu0 %v1322
        %1326 = vmatprep.subr.bf16.mxu0 0
        %1327 = vmatpush1.bf16.msra.mxu0 0
        %1328 = vmatprep.subr.bf16.mxu0 0
        %1329 = vmatpush1.bf16.msra.mxu0 0
        %1330 = vmatprep.subr.bf16.mxu0 0
        %1331 = vmatpush1.bf16.msra.mxu0 0
        %1332 = vmatprep.subr.bf16.mxu0 0
        %1333 = vmatpush1.bf16.msra.mxu0 0
        %1334 = vmatprep.subr.bf16.mxu0 0
        %1335 = vmatpush1.bf16.msra.mxu0 0
        %1336 = vmatprep.subr.bf16.mxu0 0
        %1337 = vmatpush1.bf16.msra.mxu0 0
        %1338 = vmatprep.subr.bf16.mxu0 0
        %1339 = vmatpush1.bf16.msra.mxu0 0
        %1340 = vmatprep.subr.bf16.mxu0 0
        %1341 = vmatpush1.bf16.msra.mxu0 0
        %1342 = vmatprep.subr.bf16.mxu0 0
        %1343 = vmatpush1.bf16.msra.mxu0 0
        %1344 = vmatprep.subr.bf16.mxu0 0
        %1345 = vmatpush1.bf16.msra.mxu0 0
        %1346 = vmatprep.subr.bf16.mxu0 0
        %1347 = vmatpush1.bf16.msra.mxu0 0
        %1348 = vmatprep.subr.bf16.mxu0 0
        %1349 = vmatpush1.bf16.msra.mxu0 0
        %1350 = vmatprep.subr.bf16.mxu0 0
        %1351 = vmatpush1.bf16.msra.mxu0 0
        %1352 = vmatprep.subr.bf16.mxu0 0
        %1353 = vmatpush1.bf16.msra.mxu0 0
        %1354 = vmatprep.subr.bf16.mxu0 0
        %1355 = vmatpush1.bf16.msra.mxu0 0
        %1356 = vmatprep.mubr.bf16.mxu0 0
        %1357 = vmatmul.mubr.bf16.gmra.mrb[0].mxu0 %v1319
        %v1358 = vpop.f32.mrb[0].mxu0
        %v1359 = vadd.f32 0.0, %v1358
        %v1360 = vpop.f32.mrb[0].mxu0
        %v1361 = vpop.f32.mrb[0].mxu0
        %v1362 = vpop.f32.mrb[0].mxu0
        %1363 = vdwg.mxu0
        %1365 = vrot.lane.b32.xlu0 %v1139, 32
        %v1366 = vpop.permute.xlu0 %1365
        %1369 = vrot.lane.b32.xlu0 %v1249, 64
        %v1370 = vpop.permute.xlu0 %1369
        %1373 = vrot.lane.b32.xlu0 %v1359, 96
        %v1374 = vpop.permute.xlu0 %1373
        %v1376 = vsel %vm924, %v1026, %v1366
        %vm1377 = vcmask 523264
        %v1378 = vsel %vm1377, %v1376, %v1370
        %vm1379 = vcmask 785408
        %v1380 = vsel %vm1379, %v1378, %v1374
        %v1381 = vpack.c.bf16 %v1380, %v1380
        %v1382 = vld [vmem:[#allocation10] sm:$0xf]
        %v1383 = vld [vmem:[#allocation10 + $0x4] sm:$0xf]
        %v1384 = vld [vmem:[#allocation10 + $0x8] sm:$0xf]
        %v1385 = vld [vmem:[#allocation10 + $0xc] sm:$0xf]
        %v1386 = vld [vmem:[#allocation10 + $0x10] sm:$0xf]
        %v1387 = vld [vmem:[#allocation10 + $0x14] sm:$0xf]
        %v1388 = vld [vmem:[#allocation10 + $0x18] sm:$0xf]
        %v1389 = vld [vmem:[#allocation10 + $0x1c] sm:$0xf]
        %v1390 = vld [vmem:[#allocation10 + $0x20] sm:$0xf]
        %v1391 = vld [vmem:[#allocation10 + $0x24] sm:$0xf]
        %v1392 = vld [vmem:[#allocation10 + $0x28] sm:$0xf]
        %v1393 = vld [vmem:[#allocation10 + $0x2c] sm:$0xf]
        %v1394 = vld [vmem:[#allocation10 + $0x30] sm:$0xf]
        %v1395 = vld [vmem:[#allocation10 + $0x34] sm:$0xf]
        %v1396 = vld [vmem:[#allocation10 + $0x38] sm:$0xf]
        %v1397 = vld [vmem:[#allocation10 + $0x3c] sm:$0xf]
        %v1398 = vld [vmem:[#allocation11] sm:$0x1]
        %v1400 = vlaneseq
        %v1401 = vshrl.u32 %v1400, 7
        %v1402 = vsub.s32 0, %v1401
        %v1403 = vrot.slane %v1398, %v1402
        %v1421 = vunpack.c.l.b16 %v1382
        %v1422 = vunpack.c.l.b16 %v1383
        %v1423 = vunpack.c.l.b16 %v1384
        %v1424 = vunpack.c.l.b16 %v1385
        %v1425 = vunpack.c.l.b16 %v1386
        %v1426 = vunpack.c.l.b16 %v1387
        %v1427 = vunpack.c.l.b16 %v1388
        %v1428 = vunpack.c.l.b16 %v1389
        %v1429 = vunpack.c.l.b16 %v1390
        %v1430 = vunpack.c.l.b16 %v1391
        %v1431 = vunpack.c.l.b16 %v1392
        %v1432 = vunpack.c.l.b16 %v1393
        %v1433 = vunpack.c.l.b16 %v1394
        %v1434 = vunpack.c.l.b16 %v1395
        %v1435 = vunpack.c.l.b16 %v1396
        %v1436 = vunpack.c.l.b16 %v1397
        %v1437 = vpack.c.b16 %v1422, %v1421
        %v1438 = vpack.c.b16 %v1424, %v1423
        %v1439 = vpack.c.b16 %v1426, %v1425
        %v1440 = vpack.c.b16 %v1428, %v1427
        %v1441 = vpack.c.b16 %v1430, %v1429
        %v1442 = vpack.c.b16 %v1432, %v1431
        %v1443 = vpack.c.b16 %v1434, %v1433
        %v1444 = vpack.c.b16 %v1436, %v1435
        %1453 = vmatprep.subr.bf16.mxu0 0
        %1454 = vmatpush1.bf16.msra.mxu0 %v1437
        %1455 = vmatprep.subr.bf16.mxu0 0
        %1456 = vmatpush1.bf16.msra.mxu0 %v1438
        %1457 = vmatprep.subr.bf16.mxu0 0
        %1458 = vmatpush1.bf16.msra.mxu0 %v1439
        %1459 = vmatprep.subr.bf16.mxu0 0
        %1460 = vmatpush1.bf16.msra.mxu0 %v1440
        %1461 = vmatprep.subr.bf16.mxu0 0
        %1462 = vmatpush1.bf16.msra.mxu0 %v1441
        %1463 = vmatprep.subr.bf16.mxu0 0
        %1464 = vmatpush1.bf16.msra.mxu0 %v1442
        %1465 = vmatprep.subr.bf16.mxu0 0
        %1466 = vmatpush1.bf16.msra.mxu0 %v1443
        %1467 = vmatprep.subr.bf16.mxu0 0
        %1468 = vmatpush1.bf16.msra.mxu0 %v1444
        %1469 = vmatprep.subr.bf16.mxu0 0
        %1470 = vmatpush1.bf16.msra.mxu0 0
        %1471 = vmatprep.subr.bf16.mxu0 0
        %1472 = vmatpush1.bf16.msra.mxu0 0
        %1473 = vmatprep.subr.bf16.mxu0 0
        %1474 = vmatpush1.bf16.msra.mxu0 0
        %1475 = vmatprep.subr.bf16.mxu0 0
        %1476 = vmatpush1.bf16.msra.mxu0 0
        %1477 = vmatprep.subr.bf16.mxu0 0
        %1478 = vmatpush1.bf16.msra.mxu0 0
        %1479 = vmatprep.subr.bf16.mxu0 0
        %1480 = vmatpush1.bf16.msra.mxu0 0
        %1481 = vmatprep.subr.bf16.mxu0 0
        %1482 = vmatpush1.bf16.msra.mxu0 0
        %1483 = vmatprep.subr.bf16.mxu0 0
        %1484 = vmatpush1.bf16.msra.mxu0 0
        %1485 = vmatprep.mubr.bf16.mxu0 0
        %1486 = vmatmul.mubr.bf16.gmra.mrb[0].mxu0 %v1381
        %v1487 = vpop.f32.mrb[0].mxu0
        %v1488 = vadd.f32 %v1403, %v1487
        %v1489 = vpop.f32.mrb[0].mxu0
        %v1490 = vpop.f32.mrb[0].mxu0
        %v1491 = vpop.f32.mrb[0].mxu0
        %1492 = vdwg.mxu0
        %v1493 = vadd.f32 %v632, %v1488
        %v1494 = vld [vmem:[#allocation13] sm:$0x1]
        %v1495 = vld [vmem:[#allocation14] sm:$0x1]
        %1496 = vadd.xlane.f32.xlu0 %v1493
        %v1497 = vpop.xlane.xlu0 %1496
        %v1498 = vmul.f32 %v1497, %v637
        %v1499 = vsub.f32 %v1493, %v1498
        %v1500 = vmul.f32 %v1499, %v1499
        %1501 = vadd.xlane.f32.xlu0 %v1500
        %v1502 = vpop.xlane.xlu0 %1501
        %v1503 = vmul.f32 %v1502, %v637
        %v1504 = vadd.f32 %v1503, 1e-06
        %v1505 = vrsqrt.pop %v1504
        %v1506 = vmul.f32 %v1499, %v1505
        %v1508 = vlaneseq
        %v1509 = vshrl.u32 %v1508, 7
        %v1510 = vsub.s32 0, %v1509
        %v1511 = vrot.slane %v1494, %v1510
        %v1513 = vmul.f32 %v1506, %v1511
        %v1515 = vlaneseq
        %v1516 = vshrl.u32 %v1515, 7
        %v1517 = vsub.s32 0, %v1516
        %v1518 = vrot.slane %v1495, %v1517
        %v1520 = vadd.f32 %v1513, %v1518
        %v1521 = vpack.c.bf16 %v1520, %v1520
        %v1522 = vld [vmem:[#allocation16] sm:$0xff]
        %v1523 = vld [vmem:[#allocation16 + $0x8] sm:$0xff]
        %v1524 = vld [vmem:[#allocation16 + $0x10] sm:$0xff]
        %v1525 = vld [vmem:[#allocation16 + $0x18] sm:$0xff]
        %v1526 = vld [vmem:[#allocation16 + $0x20] sm:$0xff]
        %v1527 = vld [vmem:[#allocation16 + $0x28] sm:$0xff]
        %v1528 = vld [vmem:[#allocation16 + $0x30] sm:$0xff]
        %v1529 = vld [vmem:[#allocation16 + $0x38] sm:$0xff]
        %v1530 = vld [vmem:[#allocation16 + $0x40] sm:$0xff]
        %v1531 = vld [vmem:[#allocation16 + $0x48] sm:$0xff]
        %v1532 = vld [vmem:[#allocation16 + $0x50] sm:$0xff]
        %v1533 = vld [vmem:[#allocation16 + $0x58] sm:$0xff]
        %v1534 = vld [vmem:[#allocation16 + $0x60] sm:$0xff]
        %v1535 = vld [vmem:[#allocation16 + $0x68] sm:$0xff]
        %v1536 = vld [vmem:[#allocation16 + $0x70] sm:$0xff]
        %v1537 = vld [vmem:[#allocation16 + $0x78] sm:$0xff]
        %v1538 = vld [vmem:[%s11] sm:$0x3]
        %v1540 = vlaneseq
        %v1541 = vshrl.u32 %v1540, 7
        %v1542 = vsub.s32 0, %v1541
        %v1543 = vrot.slane %v1538, %v1542
        %v1544 = vlaneseq
        %v1545 = vshrl.u32 %v1544, 7
        %v1546 = vsub.s32 1, %v1545
        %v1547 = vrot.slane %v1538, %v1546
        %v1566 = vunpack.c.l.b16 %v1522
        %v1567 = vunpack.c.h.b16 %v1522
        %v1568 = vunpack.c.l.b16 %v1523
        %v1569 = vunpack.c.h.b16 %v1523
        %v1570 = vunpack.c.l.b16 %v1524
        %v1571 = vunpack.c.h.b16 %v1524
        %v1572 = vunpack.c.l.b16 %v1525
        %v1573 = vunpack.c.h.b16 %v1525
        %v1574 = vunpack.c.l.b16 %v1526
        %v1575 = vunpack.c.h.b16 %v1526
        %v1576 = vunpack.c.l.b16 %v1527
        %v1577 = vunpack.c.h.b16 %v1527
        %v1578 = vunpack.c.l.b16 %v1528
        %v1579 = vunpack.c.h.b16 %v1528
        %v1580 = vunpack.c.l.b16 %v1529
        %v1581 = vunpack.c.h.b16 %v1529
        %v1582 = vunpack.c.l.b16 %v1530
        %v1583 = vunpack.c.h.b16 %v1530
        %v1584 = vunpack.c.l.b16 %v1531
        %v1585 = vunpack.c.h.b16 %v1531
        %v1586 = vunpack.c.l.b16 %v1532
        %v1587 = vunpack.c.h.b16 %v1532
        %v1588 = vunpack.c.l.b16 %v1533
        %v1589 = vunpack.c.h.b16 %v1533
        %v1590 = vunpack.c.l.b16 %v1534
        %v1591 = vunpack.c.h.b16 %v1534
        %v1592 = vunpack.c.l.b16 %v1535
        %v1593 = vunpack.c.h.b16 %v1535
        %v1594 = vunpack.c.l.b16 %v1536
        %v1595 = vunpack.c.h.b16 %v1536
        %v1596 = vunpack.c.l.b16 %v1537
        %v1597 = vunpack.c.h.b16 %v1537
        %v1598 = vpack.c.b16 %v1568, %v1566
        %v1599 = vpack.c.b16 %v1569, %v1567
        %v1600 = vpack.c.b16 %v1572, %v1570
        %v1601 = vpack.c.b16 %v1573, %v1571
        %v1602 = vpack.c.b16 %v1576, %v1574
        %v1603 = vpack.c.b16 %v1577, %v1575
        %v1604 = vpack.c.b16 %v1580, %v1578
        %v1605 = vpack.c.b16 %v1581, %v1579
        %v1606 = vpack.c.b16 %v1584, %v1582
        %v1607 = vpack.c.b16 %v1585, %v1583
        %v1608 = vpack.c.b16 %v1588, %v1586
        %v1609 = vpack.c.b16 %v1589, %v1587
        %v1610 = vpack.c.b16 %v1592, %v1590
        %v1611 = vpack.c.b16 %v1593, %v1591
        %v1612 = vpack.c.b16 %v1596, %v1594
        %v1613 = vpack.c.b16 %v1597, %v1595
        %1630 = vmatprep.subr.bf16.mxu0 %v1599
        %1631 = vmatpush1.bf16.msra.mxu0 %v1598
        %1632 = vmatprep.subr.bf16.mxu0 %v1601
        %1633 = vmatpush1.bf16.msra.mxu0 %v1600
        %1634 = vmatprep.subr.bf16.mxu0 %v1603
        %1635 = vmatpush1.bf16.msra.mxu0 %v1602
        %1636 = vmatprep.subr.bf16.mxu0 %v1605
        %1637 = vmatpush1.bf16.msra.mxu0 %v1604
        %1638 = vmatprep.subr.bf16.mxu0 %v1607
        %1639 = vmatpush1.bf16.msra.mxu0 %v1606
        %1640 = vmatprep.subr.bf16.mxu0 %v1609
        %1641 = vmatpush1.bf16.msra.mxu0 %v1608
        %1642 = vmatprep.subr.bf16.mxu0 %v1611
        %1643 = vmatpush1.bf16.msra.mxu0 %v1610
        %1644 = vmatprep.subr.bf16.mxu0 %v1613
        %1645 = vmatpush1.bf16.msra.mxu0 %v1612
        %1646 = vmatprep.subr.bf16.mxu0 0
        %1647 = vmatpush1.bf16.msra.mxu0 0
        %1648 = vmatprep.subr.bf16.mxu0 0
        %1649 = vmatpush1.bf16.msra.mxu0 0
        %1650 = vmatprep.subr.bf16.mxu0 0
        %1651 = vmatpush1.bf16.msra.mxu0 0
        %1652 = vmatprep.subr.bf16.mxu0 0
        %1653 = vmatpush1.bf16.msra.mxu0 0
        %1654 = vmatprep.subr.bf16.mxu0 0
        %1655 = vmatpush1.bf16.msra.mxu0 0
        %1656 = vmatprep.subr.bf16.mxu0 0
        %1657 = vmatpush1.bf16.msra.mxu0 0
        %1658 = vmatprep.subr.bf16.mxu0 0
        %1659 = vmatpush1.bf16.msra.mxu0 0
        %1660 = vmatprep.subr.bf16.mxu0 0
        %1661 = vmatpush1.bf16.msra.mxu0 0
        %1662 = vmatprep.mubr.bf16.mxu0 0
        %1663 = vmatmul.mubr.bf16.gmra.mrb[0].mxu0 %v1521
        %v1664 = vpop.f32.mrb[0].mxu0
        %v1665 = vadd.f32 %v1543, %v1664
        %v1666 = vpop.f32.mrb[0].mxu0
        %v1667 = vadd.f32 %v1547, %v1666
        %v1668 = vpop.f32.mrb[0].mxu0
        %v1669 = vpop.f32.mrb[0].mxu0
        %1670 = vdwg.mxu0
        %v1671 = vmul.f32 %v1665, 0.5
        %v1672 = vmul.f32 %v1667, 0.5
        %v1673 = vmul.f32 %v1665, 0.044715
        %v1674 = vmul.f32 %v1667, 0.044715
        %v1675 = vmul.f32 %v1673, %v1665
        %v1676 = vmul.f32 %v1674, %v1667
        %v1677 = vmul.f32 %v1675, %v1665
        %v1678 = vmul.f32 %v1676, %v1667
        %v1679 = vadd.f32 %v1665, %v1677
        %v1680 = vadd.f32 %v1667, %v1678
        %v1681 = vmul.f32 %v1679, 0.7978846
        %v1682 = vmul.f32 %v1680, 0.7978846
        %v1683 = vtanh.pop %v1681
        %v1684 = vtanh.pop %v1682
        %v1685 = vadd.f32 %v1683, 1.0
        %v1686 = vadd.f32 %v1684, 1.0
        %v1687 = vmul.f32 %v1671, %v1685
        %v1688 = vmul.f32 %v1672, %v1686
        %v1689 = vpack.c.bf16 %v1687, %v1687
        %v1690 = vpack.c.bf16 %v1688, %v1688
        %v1691 = vld [vmem:[#allocation17] sm:$0xf]
        %v1692 = vld [vmem:[#allocation17 + $0x4] sm:$0xf]
        %v1693 = vld [vmem:[#allocation17 + $0x8] sm:$0xf]
        %v1694 = vld [vmem:[#allocation17 + $0xc] sm:$0xf]
        %v1695 = vld [vmem:[#allocation17 + $0x10] sm:$0xf]
        %v1696 = vld [vmem:[#allocation17 + $0x14] sm:$0xf]
        %v1697 = vld [vmem:[#allocation17 + $0x18] sm:$0xf]
        %v1698 = vld [vmem:[#allocation17 + $0x1c] sm:$0xf]
        %v1699 = vld [vmem:[#allocation17 + $0x20] sm:$0xf]
        %v1700 = vld [vmem:[#allocation17 + $0x24] sm:$0xf]
        %v1701 = vld [vmem:[#allocation17 + $0x28] sm:$0xf]
        %v1702 = vld [vmem:[#allocation17 + $0x2c] sm:$0xf]
        %v1703 = vld [vmem:[#allocation17 + $0x30] sm:$0xf]
        %v1704 = vld [vmem:[#allocation17 + $0x34] sm:$0xf]
        %v1705 = vld [vmem:[#allocation17 + $0x38] sm:$0xf]
        %v1706 = vld [vmem:[#allocation17 + $0x3c] sm:$0xf]
        %v1707 = vld [vmem:[#allocation17 + $0x40] sm:$0xf]
        %v1708 = vld [vmem:[#allocation17 + $0x44] sm:$0xf]
        %v1709 = vld [vmem:[#allocation17 + $0x48] sm:$0xf]
        %v1710 = vld [vmem:[#allocation17 + $0x4c] sm:$0xf]
        %v1711 = vld [vmem:[#allocation17 + $0x50] sm:$0xf]
        %v1712 = vld [vmem:[#allocation17 + $0x54] sm:$0xf]
        %v1713 = vld [vmem:[#allocation17 + $0x58] sm:$0xf]
        %v1714 = vld [vmem:[#allocation17 + $0x5c] sm:$0xf]
        %v1715 = vld [vmem:[#allocation17 + $0x60] sm:$0xf]
        %v1716 = vld [vmem:[#allocation17 + $0x64] sm:$0xf]
        %v1717 = vld [vmem:[#allocation17 + $0x68] sm:$0xf]
        %v1718 = vld [vmem:[#allocation17 + $0x6c] sm:$0xf]
        %v1719 = vld [vmem:[#allocation17 + $0x70] sm:$0xf]
        %v1720 = vld [vmem:[#allocation17 + $0x74] sm:$0xf]
        %v1721 = vld [vmem:[#allocation17 + $0x78] sm:$0xf]
        %v1722 = vld [vmem:[#allocation17 + $0x7c] sm:$0xf]
        %v1723 = vld [vmem:[#allocation19] sm:$0x1]
        %v1725 = vlaneseq
        %v1726 = vshrl.u32 %v1725, 7
        %v1727 = vsub.s32 0, %v1726
        %v1728 = vrot.slane %v1723, %v1727
        %v1762 = vunpack.c.l.b16 %v1691
        %v1763 = vunpack.c.l.b16 %v1692
        %v1764 = vunpack.c.l.b16 %v1693
        %v1765 = vunpack.c.l.b16 %v1694
        %v1766 = vunpack.c.l.b16 %v1695
        %v1767 = vunpack.c.l.b16 %v1696
        %v1768 = vunpack.c.l.b16 %v1697
        %v1769 = vunpack.c.l.b16 %v1698
        %v1770 = vunpack.c.l.b16 %v1699
        %v1771 = vunpack.c.l.b16 %v1700
        %v1772 = vunpack.c.l.b16 %v1701
        %v1773 = vunpack.c.l.b16 %v1702
        %v1774 = vunpack.c.l.b16 %v1703
        %v1775 = vunpack.c.l.b16 %v1704
        %v1776 = vunpack.c.l.b16 %v1705
        %v1777 = vunpack.c.l.b16 %v1706
        %v1778 = vunpack.c.l.b16 %v1707
        %v1779 = vunpack.c.l.b16 %v1708
        %v1780 = vunpack.c.l.b16 %v1709
        %v1781 = vunpack.c.l.b16 %v1710
        %v1782 = vunpack.c.l.b16 %v1711
        %v1783 = vunpack.c.l.b16 %v1712
        %v1784 = vunpack.c.l.b16 %v1713
        %v1785 = vunpack.c.l.b16 %v1714
        %v1786 = vunpack.c.l.b16 %v1715
        %v1787 = vunpack.c.l.b16 %v1716
        %v1788 = vunpack.c.l.b16 %v1717
        %v1789 = vunpack.c.l.b16 %v1718
        %v1790 = vunpack.c.l.b16 %v1719
        %v1791 = vunpack.c.l.b16 %v1720
        %v1792 = vunpack.c.l.b16 %v1721
        %v1793 = vunpack.c.l.b16 %v1722
        %v1794 = vpack.c.b16 %v1763, %v1762
        %v1795 = vpack.c.b16 %v1765, %v1764
        %v1796 = vpack.c.b16 %v1767, %v1766
        %v1797 = vpack.c.b16 %v1769, %v1768
        %v1798 = vpack.c.b16 %v1771, %v1770
        %v1799 = vpack.c.b16 %v1773, %v1772
        %v1800 = vpack.c.b16 %v1775, %v1774
        %v1801 = vpack.c.b16 %v1777, %v1776
        %v1802 = vpack.c.b16 %v1779, %v1778
        %v1803 = vpack.c.b16 %v1781, %v1780
        %v1804 = vpack.c.b16 %v1783, %v1782
        %v1805 = vpack.c.b16 %v1785, %v1784
        %v1806 = vpack.c.b16 %v1787, %v1786
        %v1807 = vpack.c.b16 %v1789, %v1788
        %v1808 = vpack.c.b16 %v1791, %v1790
        %v1809 = vpack.c.b16 %v1793, %v1792
        %1826 = vmatprep.subr.bf16.mxu0 0
        %1827 = vmatpush1.bf16.msra.mxu0 %v1794
        %1828 = vmatprep.subr.bf16.mxu0 0
        %1829 = vmatpush1.bf16.msra.mxu0 %v1795
        %1830 = vmatprep.subr.bf16.mxu0 0
        %1831 = vmatpush1.bf16.msra.mxu0 %v1796
        %1832 = vmatprep.subr.bf16.mxu0 0
        %1833 = vmatpush1.bf16.msra.mxu0 %v1797
        %1834 = vmatprep.subr.bf16.mxu0 0
        %1835 = vmatpush1.bf16.msra.mxu0 %v1798
        %1836 = vmatprep.subr.bf16.mxu0 0
        %1837 = vmatpush1.bf16.msra.mxu0 %v1799
        %1838 = vmatprep.subr.bf16.mxu0 0
        %1839 = vmatpush1.bf16.msra.mxu0 %v1800
        %1840 = vmatprep.subr.bf16.mxu0 0
        %1841 = vmatpush1.bf16.msra.mxu0 %v1801
        %1842 = vmatprep.subr.bf16.mxu0 0
        %1843 = vmatpush1.bf16.msra.mxu0 %v1802
        %1844 = vmatprep.subr.bf16.mxu0 0
        %1845 = vmatpush1.bf16.msra.mxu0 %v1803
        %1846 = vmatprep.subr.bf16.mxu0 0
        %1847 = vmatpush1.bf16.msra.mxu0 %v1804
        %1848 = vmatprep.subr.bf16.mxu0 0
        %1849 = vmatpush1.bf16.msra.mxu0 %v1805
        %1850 = vmatprep.subr.bf16.mxu0 0
        %1851 = vmatpush1.bf16.msra.mxu0 %v1806
        %1852 = vmatprep.subr.bf16.mxu0 0
        %1853 = vmatpush1.bf16.msra.mxu0 %v1807
        %1854 = vmatprep.subr.bf16.mxu0 0
        %1855 = vmatpush1.bf16.msra.mxu0 %v1808
        %1856 = vmatprep.subr.bf16.mxu0 0
        %1857 = vmatpush1.bf16.msra.mxu0 %v1809
        %1858 = vmatprep.mubr.bf16.mxu0 %v1690
        %1859 = vmatmul.mubr.bf16.gmra.mrb[0].mxu0 %v1689
        %v1860 = vpop.f32.mrb[0].mxu0
        %v1861 = vadd.f32 %v1728, %v1860
        %v1862 = vpop.f32.mrb[0].mxu0
        %v1863 = vpop.f32.mrb[0].mxu0
        %v1864 = vpop.f32.mrb[0].mxu0
        %1865 = vdwg.mxu0
        %v1866 = vadd.f32 %v1493, %v1861
        %1867 = vst [vmem:[%s626] sm:$0xff] %v1866
        %s1868 = sand.u32 %s348, 1
        %s1869 = scalar_lea.sflag [#allocation4], %s1868
        %s1870 = sand.u32 %s348, 1
        %s1871 = smul.addr %s1870, 8
        %s1872 = scalar_lea.vmem [#allocation20], %s1871
        // Predicated region
        $region121: #{transformer_block_forward.1} parent=75 // pred_check
          %p1873 = pneg %p358
        $region122: #{transformer_block_forward.1} parent=75 // pred_check_branch
          %1875 = sbr.rel (%p1873) target = $region124
        $region123: #{transformer_block_forward.1} parent=75 // pred_region
          %s1877 = ssub.s32 128, 128
          %1878 = vsyncadd %s1869, %s1877
          %s1879 = smul.addr %s36, 128
          %s1880 = scalar_lea.hbm %s14, %s1879
          %s1882 = sshll.u32 %s1872, 4
          %s1883 = int_to_ptr.vmem [resolvable:$true] %s1882
          %1885 = dma.vmem_to_hbm [thread:$0]  %s1883, 128, %s1880, %s1869
        $region124: #{transformer_block_forward.1} parent=75 // pred_fallthru
          _
      $region76: #{transformer_block_forward.1} parent=5 // pred_fallthru
        _
      %p1886 = scmp.le.s32.totalorder 2, %s31
      // Predicated region
      $region125: #{transformer_block_forward.1} parent=5 // pred_check
        %p1887 = pneg %p1886
      $region126: #{transformer_block_forward.1} parent=5 // pred_check_branch
        %1889 = sbr.rel (%p1887) target = $region128
      $region127: #{transformer_block_forward.1} parent=5 // pred_region
        %s1890 = ssub.s32 %s31, 2
        // Predicated region
        $region129: #{transformer_block_forward.1} parent=127 // pred_check
          %p1891 = pneg %p364
        $region130: #{transformer_block_forward.1} parent=127 // pred_check_branch
          %1893 = sbr.rel (%p1891) target = $region132
        $region131: #{transformer_block_forward.1} parent=127 // pred_region
          %s1894 = sand.u32 %s349, 1
          %s1895 = scalar_lea.sflag [#allocation4], %s1894
          %s1896 = sand.u32 %s349, 1
          %s1897 = smul.addr %s1896, 8
          %s1898 = scalar_lea.vmem [#allocation20], %s1897
          %1899 = dma.done %s1895, 128
        $region132: #{transformer_block_forward.1} parent=127 // pred_fallthru
          _
      $region128: #{transformer_block_forward.1} parent=5 // pred_fallthru
        _
    $region6: #{transformer_block_forward.1} parent=1 // loop_footer
      %s35 = sadd.s32 1, %s31
    $region7: #{transformer_block_forward.1} parent=1 // loop_footer_branch
      %30 = sbr.rel target = $region3
    $region8: #{transformer_block_forward.1} parent=1 // loop_exit
      _
    %1900 = vsyncpa [#allocation3], 1
    %s1901 = scalar_lea.sflag [#allocation3], 1
    %1902 = vsyncpa %s1901, 1
    %1903 = vsyncpa [#allocation6], 1
    %1904 = vsyncpa [#allocation9], 1
    %1905 = vsyncpa [#allocation12], 1
    %1906 = vsyncpa [#allocation15], 1
    %1907 = vsyncpa [#allocation18], 1
    %1908 = vsyncpa [#allocation4], 1
    %s1909 = scalar_lea.sflag [#allocation4], 1
    %1910 = vsyncpa %s1909, 1

</llo_original>
